<compile_context>
chip_gen: v5e
topology: v5e:2x2
jax: 0.10.0
libtpu: 0.0.40
codegen_flags: <defaults>
</compile_context>

<pallas_src>
import functools

import jax
import jax.numpy as jnp
from jax import lax
from jax.experimental import pallas as pl
from jax.experimental.pallas import tpu as pltpu


def _round_up(x, m):
    return (x + m - 1) // m * m


# ---------------------------------------------------------------------------
# Kernel 1: row-tiled dense layer, full weight resident in VMEM.
#   o = x @ w + b   (used for the qkv projection; the output projection is
#                    fused into the attention kernel below)
# ---------------------------------------------------------------------------
def _linear_kernel(x_ref, w_ref, b_ref, o_ref):
    acc = jnp.dot(x_ref[...], w_ref[...], preferred_element_type=jnp.float32)
    o_ref[...] = (acc + b_ref[...].astype(jnp.float32)).astype(o_ref.dtype)


def pallas_linear(x2d, w, b, *, tm=256):
    """x2d: (M, K), w: (K, Nout), b: (Nout,) -> (M, Nout).

    Grid = (ceil(M/tm),) over row tiles; the (K, Nout) weight and the bias use
    constant index maps so they are fetched from HBM exactly once and stay
    resident in VMEM.  M is padded up to a tile multiple (no divisor search,
    no degenerate 8-row tiles for prime sequence lengths such as N=197).
    """
    M, K = x2d.shape
    K2, Nout = w.shape
    assert K == K2 and b.shape == (Nout,)

    tm = min(tm, _round_up(M, 8))          # sublane-aligned row tile
    Mp = _round_up(M, tm)
    if Mp != M:
        x2d = jnp.pad(x2d, ((0, Mp - M), (0, 0)))

    out = pl.pallas_call(
        _linear_kernel,
        out_shape=jax.ShapeDtypeStruct((Mp, Nout), x2d.dtype),
        grid=(Mp // tm,),
        in_specs=[
            pl.BlockSpec((tm, K), lambda i: (i, 0)),      # streamed row tile
            pl.BlockSpec((K, Nout), lambda i: (0, 0)),    # weight: resident
            pl.BlockSpec((1, Nout), lambda i: (0, 0)),    # bias:   resident
        ],
        out_specs=pl.BlockSpec((tm, Nout), lambda i: (i, 0)),
        compiler_params=pltpu.CompilerParams(
            dimension_semantics=("parallel",)),
    )(x2d, w, b.reshape(1, Nout))
    return out[:M] if Mp != M else out


# ---------------------------------------------------------------------------
# Kernel 2: fused multi-head attention + output projection.
#   grid = (B, head_groups); each step handles one batch row-block and one
#   128-lane-wide group of heads, accumulating its partial output projection
#   into a f32 (N, C) scratch; the final (1, N, C) block is stored once.
# ---------------------------------------------------------------------------
def _attn_proj_kernel(q_ref, k_ref, v_ref, wp_ref, bp_ref, o_ref, acc_ref,
                      *, heads_per_group, head_dim, scale):
    g = pl.program_id(1)

    @pl.when(g == 0)
    def _():
        acc_ref[...] = jnp.zeros_like(acc_ref)

    qg = q_ref[0]          # (N, GW) bf16, GW = heads_per_group * head_dim
    kg = k_ref[0]
    vg = v_ref[0]

    head_outs = []
    for h in range(heads_per_group):       # small static unroll within 128 lanes
        sl = slice(h * head_dim, (h + 1) * head_dim)
        q, k, v = qg[:, sl], kg[:, sl], vg[:, sl]

        # scores: contract the head dim of BOTH operands -> no k.T transpose.
        s = lax.dot_general(q, k, (((1,), (1,)), ((), ())),
                            preferred_element_type=jnp.float32)   # (N, N) f32
        s = s * scale                                             # hidden by MXU

        # softmax in f32; denominator via EUP approx reciprocal (free slot).
        m = jnp.max(s, axis=-1, keepdims=True)
        p = jnp.exp(s - m)
        p = p * pl.reciprocal(jnp.sum(p, axis=-1, keepdims=True), approx=True)

        o = jnp.dot(p.astype(v.dtype), v,
                    preferred_element_type=jnp.float32)           # (N, D)
        head_outs.append(o.astype(v.dtype))

    o_grp = (jnp.concatenate(head_outs, axis=-1)
             if len(head_outs) > 1 else head_outs[0])             # (N, GW) bf16

    # Partial output projection: this head group only touches rows
    # [g*GW, (g+1)*GW) of w_proj, delivered by the BlockSpec.
    acc_ref[...] += jnp.dot(o_grp, wp_ref[...],
                            preferred_element_type=jnp.float32)

    @pl.when(g == pl.num_programs(1) - 1)
    def _():
        o_ref[0] = (acc_ref[...] + bp_ref[...].astype(jnp.float32)
                    ).astype(o_ref.dtype)


def _pick_heads_per_group(num_heads, head_dim):
    """Smallest divisor G of num_heads whose group width G*head_dim is a
    multiple of 128 lanes (so q/k/v group tiles are lane-tile aligned)."""
    for g in range(1, num_heads + 1):
        if num_heads % g == 0 and (g * head_dim) % 128 == 0:
            return g
    # TODO(synk): head widths that cannot tile to 128 lanes fall back to a
    # single all-heads group (requires C itself to be lane-friendly).
    return num_heads


def pallas_attention_proj(qkv, w_proj, b_proj, num_heads, scale, out_dtype):
    """qkv: (B, N, 3C) laid out [q | k | v] -> attention(qkv) @ w_proj + b_proj."""
    B, N, C3 = qkv.shape
    C = C3 // 3
    D = C // num_heads
    G = _pick_heads_per_group(num_heads, D)
    GW = G * D
    n_groups = num_heads // G

    kernel = functools.partial(_attn_proj_kernel, heads_per_group=G,
                               head_dim=D, scale=scale)
    return pl.pallas_call(
        kernel,
        out_shape=jax.ShapeDtypeStruct((B, N, C), out_dtype),
        grid=(B, n_groups),
        in_specs=[
            pl.BlockSpec((1, N, GW), lambda b, g: (b, 0, g)),                 # q grp
            pl.BlockSpec((1, N, GW), lambda b, g: (b, 0, g + n_groups)),      # k grp
            pl.BlockSpec((1, N, GW), lambda b, g: (b, 0, g + 2 * n_groups)),  # v grp
            pl.BlockSpec((GW, C), lambda b, g: (g, 0)),                       # w_proj rows
            pl.BlockSpec((1, C), lambda b, g: (0, 0)),                        # b_proj
        ],
        out_specs=pl.BlockSpec((1, N, C), lambda b, g: (b, 0, 0)),
        scratch_shapes=[pltpu.VMEM((N, C), jnp.float32)],
        compiler_params=pltpu.CompilerParams(
            dimension_semantics=("parallel", "arbitrary")),
    )(qkv, qkv, qkv, w_proj, b_proj.reshape(1, C))


# ---------------------------------------------------------------------------
# Full module forward (glue is reshapes only -- no HBM transposes)
# ---------------------------------------------------------------------------
def attention_forward(x, params, num_heads):
    """`params` should already be in the bf16 compute dtype (prepare_params)."""
    B, N, C = x.shape
    D = C // num_heads
    scale = D ** (-0.5)
    cdt = params["w_qkv"].dtype

    xr = x.reshape(B * N, C).astype(cdt)                          # bf16 activations
    qkv = pallas_linear(xr, params["w_qkv"], params["b_qkv"])     # (B*N, 3C)
    qkv = qkv.reshape(B, N, 3 * C)                                # pure reshape

    # attn_drop / proj_drop have p = 0.0 (eval) -> identity.
    return pallas_attention_proj(qkv, params["w_proj"], params["b_proj"],
                                 num_heads, scale, x.dtype)


def init_params(key, dim):
    """Deterministic synthetic parameters (module __init__ shapes), f32."""
    k1, k2, k3 = jax.random.split(key, 3)
    w_qkv = jax.random.normal(k1, (dim, 3 * dim), jnp.float32) * 0.1
    b_qkv = jnp.zeros((3 * dim,), jnp.float32)          # qkv_bias=False
    w_proj = jax.random.normal(k2, (dim, dim), jnp.float32) * 0.1
    b_proj = jax.random.normal(k3, (dim,), jnp.float32) * 0.1
    return {"w_qkv": w_qkv, "b_qkv": b_qkv, "w_proj": w_proj, "b_proj": b_proj}


def prepare_params(params, dtype=jnp.bfloat16):
    """One-time parameter prep: cast weights/biases to the bf16 compute dtype."""
    return {k: v.astype(dtype) for k, v in params.items()}


def attention_reference(x, params, num_heads):
    """Pure-JAX f32 reference mirroring the PyTorch module."""
    B, N, C = x.shape
    D = C // num_heads
    scale = D ** (-0.5)
    qkv = x @ params["w_qkv"] + params["b_qkv"]
    qkv = qkv.reshape(B, N, 3, num_heads, D).transpose(2, 0, 3, 1, 4)
    q, k, v = qkv[0] * scale, qkv[1], qkv[2]
    s = jnp.einsum("bhnd,bhmd->bhnm", q, k)
    p = jax.nn.softmax(s, axis=-1)
    o = jnp.einsum("bhnm,bhmd->bhnd", p, v)
    o = o.transpose(0, 2, 1, 3).reshape(B, N, C)
    return o @ params["w_proj"] + params["b_proj"]


if __name__ == "__main__":
    # small shapes consistent with the module: batch=2, seq=16, dim=128, heads=8
    B, N, C, H = 2, 16, 128, 8

    key = jax.random.PRNGKey(0)
    kx, kp = jax.random.split(key)
    x = jax.random.normal(kx, (B, N, C), jnp.float32)
    params_f32 = init_params(kp, C)
    params = prepare_params(params_f32)          # one-time bf16 param prep

    fwd = jax.jit(functools.partial(attention_forward, num_heads=H))
    out = jax.block_until_ready(fwd(x, params))
    assert out.shape == (B, N, C) and out.dtype == x.dtype

    ref = attention_reference(x, params_f32, H)
    err = float(jnp.max(jnp.abs(out - ref)))
    # bf16 weights/activations with f32 accumulation & f32 softmax vs f32 ref.
    assert jnp.allclose(out, ref, rtol=1e-1, atol=1e-1), f"max abs err {err}"

    print("KERNEL_OK")
</pallas_src>

<mosaic_0001>
module attributes {stable_mosaic.version = 11 : i64} {
  func.func @_linear_kernel(%arg0: i32, %arg1: memref<32x128xbf16, #tpu.memory_space<vmem>>, %arg2: memref<128x384xbf16, #tpu.memory_space<vmem>>, %arg3: memref<1x384xbf16, #tpu.memory_space<vmem>>, %arg4: memref<32x384xbf16, #tpu.memory_space<vmem>>) attributes {dimension_semantics = [#tpu.dimension_semantics<parallel>], iteration_bounds = array<i64: 1>, scalar_prefetch = 0 : i64, scratch_operands = 0 : i64, tpu.core_type = #tpu.core_type<tc>, window_params = [{transform_indices = @transform_0, window_bounds = array<i64: 32, 128>}, {pipeline_mode = #tpu.pipeline_mode<synchronous>, transform_indices = @transform_1, window_bounds = array<i64: 128, 384>}, {pipeline_mode = #tpu.pipeline_mode<synchronous>, transform_indices = @transform_2, window_bounds = array<i64: 1, 384>}, {transform_indices = @transform_3, window_bounds = array<i64: 32, 384>}]} {
    %c0 = arith.constant 0 : index
    %c0_0 = arith.constant 0 : index
    %0 = vector.load %arg1[%c0, %c0_0] : memref<32x128xbf16, #tpu.memory_space<vmem>>, vector<32x128xbf16>
    %c0_1 = arith.constant 0 : index
    %c0_2 = arith.constant 0 : index
    %1 = vector.load %arg2[%c0_1, %c0_2] : memref<128x384xbf16, #tpu.memory_space<vmem>>, vector<128x384xbf16>
    %cst = arith.constant dense<0.000000e+00> : vector<32x384xf32>
    %2 = tpu.matmul %0, %1, %cst {dimension_numbers = #tpu.dot_dimension_numbers<[1], [0], [0], [1], [0, 0, 1, 1], [], []>} : vector<32x128xbf16>, vector<128x384xbf16>, vector<32x384xf32> -> vector<32x384xf32>
    %c0_3 = arith.constant 0 : index
    %c0_4 = arith.constant 0 : index
    %3 = vector.load %arg3[%c0_3, %c0_4] : memref<1x384xbf16, #tpu.memory_space<vmem>>, vector<1x384xbf16>
    %4 = arith.extf %3 : vector<1x384xbf16> to vector<1x384xf32>
    %5 = vector.broadcast %4 : vector<1x384xf32> to vector<32x384xf32>
    %6 = arith.addf %2, %5 : vector<32x384xf32>
    %7 = arith.truncf %6 : vector<32x384xf32> to vector<32x384xbf16>
    %c0_5 = arith.constant 0 : index
    %c0_6 = arith.constant 0 : index
    %8 = vector.load %arg4[%c0_5, %c0_6] : memref<32x384xbf16, #tpu.memory_space<vmem>>, vector<32x384xbf16>
    tpu.vector_store %arg4[%c0_5, %c0_6], %7 {strides = array<i32>} : memref<32x384xbf16, #tpu.memory_space<vmem>>, vector<32x384xbf16>,
    return
  }
  func.func @transform_0(%arg0: i32) -> (i32, i32) {
    %c0_i32 = arith.constant 0 : i32
    %c0_i32_0 = arith.constant 0 : i32
    return %arg0, %c0_i32 : i32, i32
  }
  func.func @transform_1(%arg0: i32) -> (i32, i32) {
    %c0_i32 = arith.constant 0 : i32
    %c0_i32_0 = arith.constant 0 : i32
    %c0_i32_1 = arith.constant 0 : i32
    return %c0_i32, %c0_i32_0 : i32, i32
  }
  func.func @transform_2(%arg0: i32) -> (i32, i32) {
    %c0_i32 = arith.constant 0 : i32
    %c0_i32_0 = arith.constant 0 : i32
    %c0_i32_1 = arith.constant 0 : i32
    return %c0_i32, %c0_i32_0 : i32, i32
  }
  func.func @transform_3(%arg0: i32) -> (i32, i32) {
    %c0_i32 = arith.constant 0 : i32
    %c0_i32_0 = arith.constant 0 : i32
    return %arg0, %c0_i32 : i32, i32
  }
}

module attributes {stable_mosaic.version = 11 : i64} {
  func.func @_attn_proj_kernel(%arg0: i32, %arg1: i32, %arg2: memref<1x16x128xbf16, #tpu.memory_space<vmem>>, %arg3: memref<1x16x128xbf16, #tpu.memory_space<vmem>>, %arg4: memref<1x16x128xbf16, #tpu.memory_space<vmem>>, %arg5: memref<128x128xbf16, #tpu.memory_space<vmem>>, %arg6: memref<1x128xbf16, #tpu.memory_space<vmem>>, %arg7: memref<1x16x128xf32, #tpu.memory_space<vmem>>, %arg8: memref<16x128xf32, #tpu.memory_space<vmem>>) attributes {dimension_semantics = [#tpu.dimension_semantics<parallel>, #tpu.dimension_semantics<arbitrary>], iteration_bounds = array<i64: 2, 1>, scalar_prefetch = 0 : i64, scratch_operands = 1 : i64, tpu.core_type = #tpu.core_type<tc>, window_params = [{transform_indices = @transform_0, window_bounds = array<i64: 1, 16, 128>}, {transform_indices = @transform_1, window_bounds = array<i64: 1, 16, 128>}, {transform_indices = @transform_2, window_bounds = array<i64: 1, 16, 128>}, {transform_indices = @transform_3, window_bounds = array<i64: 128, 128>}, {pipeline_mode = #tpu.pipeline_mode<synchronous>, transform_indices = @transform_4, window_bounds = array<i64: 1, 128>}, {transform_indices = @transform_5, window_bounds = array<i64: 1, 16, 128>}]} {
    %c0_i32 = arith.constant 0 : i32
    %0 = arith.cmpi eq, %arg1, %c0_i32 : i32
    %1 = arith.extui %0 : i1 to i32
    %c0_i32_0 = arith.constant 0 : i32
    %2 = arith.cmpi ne, %1, %c0_i32_0 : i32
    scf.if %2 {
      %cst_57 = arith.constant 0.000000e+00 : f32
      %170 = vector.broadcast %cst_57 : f32 to vector<16x128xf32>
      %c0_58 = arith.constant 0 : index
      %c0_59 = arith.constant 0 : index
      %171 = vector.load %arg8[%c0_58, %c0_59] : memref<16x128xf32, #tpu.memory_space<vmem>>, vector<16x128xf32>
      tpu.vector_store %arg8[%c0_58, %c0_59], %170 {strides = array<i32>} : memref<16x128xf32, #tpu.memory_space<vmem>>, vector<16x128xf32>,
    } else {
    }
    %c0 = arith.constant 0 : index
    %c0_1 = arith.constant 0 : index
    %c0_2 = arith.constant 0 : index
    %3 = vector.load %arg2[%c0, %c0_1, %c0_2] : memref<1x16x128xbf16, #tpu.memory_space<vmem>>, vector<1x16x128xbf16>
    %4 = vector.shape_cast %3 : vector<1x16x128xbf16> to vector<16x128xbf16>
    %c0_3 = arith.constant 0 : index
    %c0_4 = arith.constant 0 : index
    %c0_5 = arith.constant 0 : index
    %5 = vector.load %arg3[%c0_3, %c0_4, %c0_5] : memref<1x16x128xbf16, #tpu.memory_space<vmem>>, vector<1x16x128xbf16>
    %6 = vector.shape_cast %5 : vector<1x16x128xbf16> to vector<16x128xbf16>
    %c0_6 = arith.constant 0 : index
    %c0_7 = arith.constant 0 : index
    %c0_8 = arith.constant 0 : index
    %7 = vector.load %arg4[%c0_6, %c0_7, %c0_8] : memref<1x16x128xbf16, #tpu.memory_space<vmem>>, vector<1x16x128xbf16>
    %8 = vector.shape_cast %7 : vector<1x16x128xbf16> to vector<16x128xbf16>
    %9 = vector.extract_strided_slice %4 {offsets = [0, 0], sizes = [16, 16], strides = [1, 1]} : vector<16x128xbf16> to vector<16x16xbf16>
    %10 = vector.extract_strided_slice %6 {offsets = [0, 0], sizes = [16, 16], strides = [1, 1]} : vector<16x128xbf16> to vector<16x16xbf16>
    %11 = vector.extract_strided_slice %8 {offsets = [0, 0], sizes = [16, 16], strides = [1, 1]} : vector<16x128xbf16> to vector<16x16xbf16>
    %cst = arith.constant dense<0.000000e+00> : vector<16x16xf32>
    %12 = tpu.matmul %9, %10, %cst {dimension_numbers = #tpu.dot_dimension_numbers<[1], [1], [0], [0], [0, 0, 1, 0], [], []>} : vector<16x16xbf16>, vector<16x16xbf16>, vector<16x16xf32> -> vector<16x16xf32>
    %cst_9 = arith.constant 2.500000e-01 : f32
    %13 = vector.broadcast %cst_9 : f32 to vector<16x16xf32>
    %14 = arith.mulf %12, %13 : vector<16x16xf32>
    %cst_10 = arith.constant dense<0xFF800000> : vector<16xf32>
    %15 = vector.multi_reduction <maximumf>, %14, %cst_10 [1] : vector<16x16xf32> to vector<16xf32>
    %16 = vector.shape_cast %15 : vector<16xf32> to vector<16x1xf32>
    %17 = vector.broadcast %16 : vector<16x1xf32> to vector<16x16xf32>
    %18 = arith.subf %14, %17 : vector<16x16xf32>
    %19 = math.exp %18 : vector<16x16xf32>
    %cst_11 = arith.constant dense<0.000000e+00> : vector<16xf32>
    %20 = vector.multi_reduction <add>, %19, %cst_11 [1] : vector<16x16xf32> to vector<16xf32>
    %21 = vector.shape_cast %20 : vector<16xf32> to vector<16x1xf32>
    %22 = tpu.reciprocal %21 {approx = true} : vector<16x1xf32> -> vector<16x1xf32>
    %23 = vector.broadcast %22 : vector<16x1xf32> to vector<16x16xf32>
    %24 = arith.mulf %19, %23 : vector<16x16xf32>
    %25 = arith.truncf %24 : vector<16x16xf32> to vector<16x16xbf16>
    %cst_12 = arith.constant dense<0.000000e+00> : vector<16x16xf32>
    %26 = tpu.matmul %25, %11, %cst_12 {dimension_numbers = #tpu.dot_dimension_numbers<[1], [0], [0], [1], [0, 0, 1, 1], [], []>} : vector<16x16xbf16>, vector<16x16xbf16>, vector<16x16xf32> -> vector<16x16xf32>
    %27 = arith.truncf %26 : vector<16x16xf32> to vector<16x16xbf16>
    %28 = vector.extract_strided_slice %4 {offsets = [0, 16], sizes = [16, 16], strides = [1, 1]} : vector<16x128xbf16> to vector<16x16xbf16>
    %29 = vector.extract_strided_slice %6 {offsets = [0, 16], sizes = [16, 16], strides = [1, 1]} : vector<16x128xbf16> to vector<16x16xbf16>
    %30 = vector.extract_strided_slice %8 {offsets = [0, 16], sizes = [16, 16], strides = [1, 1]} : vector<16x128xbf16> to vector<16x16xbf16>
    %cst_13 = arith.constant dense<0.000000e+00> : vector<16x16xf32>
    %31 = tpu.matmul %28, %29, %cst_13 {dimension_numbers = #tpu.dot_dimension_numbers<[1], [1], [0], [0], [0, 0, 1, 0], [], []>} : vector<16x16xbf16>, vector<16x16xbf16>, vector<16x16xf32> -> vector<16x16xf32>
    %cst_14 = arith.constant 2.500000e-01 : f32
    %32 = vector.broadcast %cst_14 : f32 to vector<16x16xf32>
    %33 = arith.mulf %31, %32 : vector<16x16xf32>
    %cst_15 = arith.constant dense<0xFF800000> : vector<16xf32>
    %34 = vector.multi_reduction <maximumf>, %33, %cst_15 [1] : vector<16x16xf32> to vector<16xf32>
    %35 = vector.shape_cast %34 : vector<16xf32> to vector<16x1xf32>
    %36 = vector.broadcast %35 : vector<16x1xf32> to vector<16x16xf32>
    %37 = arith.subf %33, %36 : vector<16x16xf32>
    %38 = math.exp %37 : vector<16x16xf32>
    %cst_16 = arith.constant dense<0.000000e+00> : vector<16xf32>
    %39 = vector.multi_reduction <add>, %38, %cst_16 [1] : vector<16x16xf32> to vector<16xf32>
    %40 = vector.shape_cast %39 : vector<16xf32> to vector<16x1xf32>
    %41 = tpu.reciprocal %40 {approx = true} : vector<16x1xf32> -> vector<16x1xf32>
    %42 = vector.broadcast %41 : vector<16x1xf32> to vector<16x16xf32>
    %43 = arith.mulf %38, %42 : vector<16x16xf32>
    %44 = arith.truncf %43 : vector<16x16xf32> to vector<16x16xbf16>
    %cst_17 = arith.constant dense<0.000000e+00> : vector<16x16xf32>
    %45 = tpu.matmul %44, %30, %cst_17 {dimension_numbers = #tpu.dot_dimension_numbers<[1], [0], [0], [1], [0, 0, 1, 1], [], []>} : vector<16x16xbf16>, vector<16x16xbf16>, vector<16x16xf32> -> vector<16x16xf32>
    %46 = arith.truncf %45 : vector<16x16xf32> to vector<16x16xbf16>
    %47 = vector.extract_strided_slice %4 {offsets = [0, 32], sizes = [16, 16], strides = [1, 1]} : vector<16x128xbf16> to vector<16x16xbf16>
    %48 = vector.extract_strided_slice %6 {offsets = [0, 32], sizes = [16, 16], strides = [1, 1]} : vector<16x128xbf16> to vector<16x16xbf16>
    %49 = vector.extract_strided_slice %8 {offsets = [0, 32], sizes = [16, 16], strides = [1, 1]} : vector<16x128xbf16> to vector<16x16xbf16>
    %cst_18 = arith.constant dense<0.000000e+00> : vector<16x16xf32>
    %50 = tpu.matmul %47, %48, %cst_18 {dimension_numbers = #tpu.dot_dimension_numbers<[1], [1], [0], [0], [0, 0, 1, 0], [], []>} : vector<16x16xbf16>, vector<16x16xbf16>, vector<16x16xf32> -> vector<16x16xf32>
    %cst_19 = arith.constant 2.500000e-01 : f32
    %51 = vector.broadcast %cst_19 : f32 to vector<16x16xf32>
    %52 = arith.mulf %50, %51 : vector<16x16xf32>
    %cst_20 = arith.constant dense<0xFF800000> : vector<16xf32>
    %53 = vector.multi_reduction <maximumf>, %52, %cst_20 [1] : vector<16x16xf32> to vector<16xf32>
    %54 = vector.shape_cast %53 : vector<16xf32> to vector<16x1xf32>
    %55 = vector.broadcast %54 : vector<16x1xf32> to vector<16x16xf32>
    %56 = arith.subf %52, %55 : vector<16x16xf32>
    %57 = math.exp %56 : vector<16x16xf32>
    %cst_21 = arith.constant dense<0.000000e+00> : vector<16xf32>
    %58 = vector.multi_reduction <add>, %57, %cst_21 [1] : vector<16x16xf32> to vector<16xf32>
    %59 = vector.shape_cast %58 : vector<16xf32> to vector<16x1xf32>
    %60 = tpu.reciprocal %59 {approx = true} : vector<16x1xf32> -> vector<16x1xf32>
    %61 = vector.broadcast %60 : vector<16x1xf32> to vector<16x16xf32>
    %62 = arith.mulf %57, %61 : vector<16x16xf32>
    %63 = arith.truncf %62 : vector<16x16xf32> to vector<16x16xbf16>
    %cst_22 = arith.constant dense<0.000000e+00> : vector<16x16xf32>
    %64 = tpu.matmul %63, %49, %cst_22 {dimension_numbers = #tpu.dot_dimension_numbers<[1], [0], [0], [1], [0, 0, 1, 1], [], []>} : vector<16x16xbf16>, vector<16x16xbf16>, vector<16x16xf32> -> vector<16x16xf32>
    %65 = arith.truncf %64 : vector<16x16xf32> to vector<16x16xbf16>
    %66 = vector.extract_strided_slice %4 {offsets = [0, 48], sizes = [16, 16], strides = [1, 1]} : vector<16x128xbf16> to vector<16x16xbf16>
    %67 = vector.extract_strided_slice %6 {offsets = [0, 48], sizes = [16, 16], strides = [1, 1]} : vector<16x128xbf16> to vector<16x16xbf16>
    %68 = vector.extract_strided_slice %8 {offsets = [0, 48], sizes = [16, 16], strides = [1, 1]} : vector<16x128xbf16> to vector<16x16xbf16>
    %cst_23 = arith.constant dense<0.000000e+00> : vector<16x16xf32>
    %69 = tpu.matmul %66, %67, %cst_23 {dimension_numbers = #tpu.dot_dimension_numbers<[1], [1], [0], [0], [0, 0, 1, 0], [], []>} : vector<16x16xbf16>, vector<16x16xbf16>, vector<16x16xf32> -> vector<16x16xf32>
    %cst_24 = arith.constant 2.500000e-01 : f32
    %70 = vector.broadcast %cst_24 : f32 to vector<16x16xf32>
    %71 = arith.mulf %69, %70 : vector<16x16xf32>
    %cst_25 = arith.constant dense<0xFF800000> : vector<16xf32>
    %72 = vector.multi_reduction <maximumf>, %71, %cst_25 [1] : vector<16x16xf32> to vector<16xf32>
    %73 = vector.shape_cast %72 : vector<16xf32> to vector<16x1xf32>
    %74 = vector.broadcast %73 : vector<16x1xf32> to vector<16x16xf32>
    %75 = arith.subf %71, %74 : vector<16x16xf32>
    %76 = math.exp %75 : vector<16x16xf32>
    %cst_26 = arith.constant dense<0.000000e+00> : vector<16xf32>
    %77 = vector.multi_reduction <add>, %76, %cst_26 [1] : vector<16x16xf32> to vector<16xf32>
    %78 = vector.shape_cast %77 : vector<16xf32> to vector<16x1xf32>
    %79 = tpu.reciprocal %78 {approx = true} : vector<16x1xf32> -> vector<16x1xf32>
    %80 = vector.broadcast %79 : vector<16x1xf32> to vector<16x16xf32>
    %81 = arith.mulf %76, %80 : vector<16x16xf32>
    %82 = arith.truncf %81 : vector<16x16xf32> to vector<16x16xbf16>
    %cst_27 = arith.constant dense<0.000000e+00> : vector<16x16xf32>
    %83 = tpu.matmul %82, %68, %cst_27 {dimension_numbers = #tpu.dot_dimension_numbers<[1], [0], [0], [1], [0, 0, 1, 1], [], []>} : vector<16x16xbf16>, vector<16x16xbf16>, vector<16x16xf32> -> vector<16x16xf32>
    %84 = arith.truncf %83 : vector<16x16xf32> to vector<16x16xbf16>
    %85 = vector.extract_strided_slice %4 {offsets = [0, 64], sizes = [16, 16], strides = [1, 1]} : vector<16x128xbf16> to vector<16x16xbf16>
    %86 = vector.extract_strided_slice %6 {offsets = [0, 64], sizes = [16, 16], strides = [1, 1]} : vector<16x128xbf16> to vector<16x16xbf16>
    %87 = vector.extract_strided_slice %8 {offsets = [0, 64], sizes = [16, 16], strides = [1, 1]} : vector<16x128xbf16> to vector<16x16xbf16>
    %cst_28 = arith.constant dense<0.000000e+00> : vector<16x16xf32>
    %88 = tpu.matmul %85, %86, %cst_28 {dimension_numbers = #tpu.dot_dimension_numbers<[1], [1], [0], [0], [0, 0, 1, 0], [], []>} : vector<16x16xbf16>, vector<16x16xbf16>, vector<16x16xf32> -> vector<16x16xf32>
    %cst_29 = arith.constant 2.500000e-01 : f32
    %89 = vector.broadcast %cst_29 : f32 to vector<16x16xf32>
    %90 = arith.mulf %88, %89 : vector<16x16xf32>
    %cst_30 = arith.constant dense<0xFF800000> : vector<16xf32>
    %91 = vector.multi_reduction <maximumf>, %90, %cst_30 [1] : vector<16x16xf32> to vector<16xf32>
    %92 = vector.shape_cast %91 : vector<16xf32> to vector<16x1xf32>
    %93 = vector.broadcast %92 : vector<16x1xf32> to vector<16x16xf32>
    %94 = arith.subf %90, %93 : vector<16x16xf32>
    %95 = math.exp %94 : vector<16x16xf32>
    %cst_31 = arith.constant dense<0.000000e+00> : vector<16xf32>
    %96 = vector.multi_reduction <add>, %95, %cst_31 [1] : vector<16x16xf32> to vector<16xf32>
    %97 = vector.shape_cast %96 : vector<16xf32> to vector<16x1xf32>
    %98 = tpu.reciprocal %97 {approx = true} : vector<16x1xf32> -> vector<16x1xf32>
    %99 = vector.broadcast %98 : vector<16x1xf32> to vector<16x16xf32>
    %100 = arith.mulf %95, %99 : vector<16x16xf32>
    %101 = arith.truncf %100 : vector<16x16xf32> to vector<16x16xbf16>
    %cst_32 = arith.constant dense<0.000000e+00> : vector<16x16xf32>
    %102 = tpu.matmul %101, %87, %cst_32 {dimension_numbers = #tpu.dot_dimension_numbers<[1], [0], [0], [1], [0, 0, 1, 1], [], []>} : vector<16x16xbf16>, vector<16x16xbf16>, vector<16x16xf32> -> vector<16x16xf32>
    %103 = arith.truncf %102 : vector<16x16xf32> to vector<16x16xbf16>
    %104 = vector.extract_strided_slice %4 {offsets = [0, 80], sizes = [16, 16], strides = [1, 1]} : vector<16x128xbf16> to vector<16x16xbf16>
    %105 = vector.extract_strided_slice %6 {offsets = [0, 80], sizes = [16, 16], strides = [1, 1]} : vector<16x128xbf16> to vector<16x16xbf16>
    %106 = vector.extract_strided_slice %8 {offsets = [0, 80], sizes = [16, 16], strides = [1, 1]} : vector<16x128xbf16> to vector<16x16xbf16>
    %cst_33 = arith.constant dense<0.000000e+00> : vector<16x16xf32>
    %107 = tpu.matmul %104, %105, %cst_33 {dimension_numbers = #tpu.dot_dimension_numbers<[1], [1], [0], [0], [0, 0, 1, 0], [], []>} : vector<16x16xbf16>, vector<16x16xbf16>, vector<16x16xf32> -> vector<16x16xf32>
    %cst_34 = arith.constant 2.500000e-01 : f32
    %108 = vector.broadcast %cst_34 : f32 to vector<16x16xf32>
    %109 = arith.mulf %107, %108 : vector<16x16xf32>
    %cst_35 = arith.constant dense<0xFF800000> : vector<16xf32>
    %110 = vector.multi_reduction <maximumf>, %109, %cst_35 [1] : vector<16x16xf32> to vector<16xf32>
    %111 = vector.shape_cast %110 : vector<16xf32> to vector<16x1xf32>
    %112 = vector.broadcast %111 : vector<16x1xf32> to vector<16x16xf32>
    %113 = arith.subf %109, %112 : vector<16x16xf32>
    %114 = math.exp %113 : vector<16x16xf32>
    %cst_36 = arith.constant dense<0.000000e+00> : vector<16xf32>
    %115 = vector.multi_reduction <add>, %114, %cst_36 [1] : vector<16x16xf32> to vector<16xf32>
    %116 = vector.shape_cast %115 : vector<16xf32> to vector<16x1xf32>
    %117 = tpu.reciprocal %116 {approx = true} : vector<16x1xf32> -> vector<16x1xf32>
    %118 = vector.broadcast %117 : vector<16x1xf32> to vector<16x16xf32>
    %119 = arith.mulf %114, %118 : vector<16x16xf32>
    %120 = arith.truncf %119 : vector<16x16xf32> to vector<16x16xbf16>
    %cst_37 = arith.constant dense<0.000000e+00> : vector<16x16xf32>
    %121 = tpu.matmul %120, %106, %cst_37 {dimension_numbers = #tpu.dot_dimension_numbers<[1], [0], [0], [1], [0, 0, 1, 1], [], []>} : vector<16x16xbf16>, vector<16x16xbf16>, vector<16x16xf32> -> vector<16x16xf32>
    %122 = arith.truncf %121 : vector<16x16xf32> to vector<16x16xbf16>
    %123 = vector.extract_strided_slice %4 {offsets = [0, 96], sizes = [16, 16], strides = [1, 1]} : vector<16x128xbf16> to vector<16x16xbf16>
    %124 = vector.extract_strided_slice %6 {offsets = [0, 96], sizes = [16, 16], strides = [1, 1]} : vector<16x128xbf16> to vector<16x16xbf16>
    %125 = vector.extract_strided_slice %8 {offsets = [0, 96], sizes = [16, 16], strides = [1, 1]} : vector<16x128xbf16> to vector<16x16xbf16>
    %cst_38 = arith.constant dense<0.000000e+00> : vector<16x16xf32>
    %126 = tpu.matmul %123, %124, %cst_38 {dimension_numbers = #tpu.dot_dimension_numbers<[1], [1], [0], [0], [0, 0, 1, 0], [], []>} : vector<16x16xbf16>, vector<16x16xbf16>, vector<16x16xf32> -> vector<16x16xf32>
    %cst_39 = arith.constant 2.500000e-01 : f32
    %127 = vector.broadcast %cst_39 : f32 to vector<16x16xf32>
    %128 = arith.mulf %126, %127 : vector<16x16xf32>
    %cst_40 = arith.constant dense<0xFF800000> : vector<16xf32>
    %129 = vector.multi_reduction <maximumf>, %128, %cst_40 [1] : vector<16x16xf32> to vector<16xf32>
    %130 = vector.shape_cast %129 : vector<16xf32> to vector<16x1xf32>
    %131 = vector.broadcast %130 : vector<16x1xf32> to vector<16x16xf32>
    %132 = arith.subf %128, %131 : vector<16x16xf32>
    %133 = math.exp %132 : vector<16x16xf32>
    %cst_41 = arith.constant dense<0.000000e+00> : vector<16xf32>
    %134 = vector.multi_reduction <add>, %133, %cst_41 [1] : vector<16x16xf32> to vector<16xf32>
    %135 = vector.shape_cast %134 : vector<16xf32> to vector<16x1xf32>
    %136 = tpu.reciprocal %135 {approx = true} : vector<16x1xf32> -> vector<16x1xf32>
    %137 = vector.broadcast %136 : vector<16x1xf32> to vector<16x16xf32>
    %138 = arith.mulf %133, %137 : vector<16x16xf32>
    %139 = arith.truncf %138 : vector<16x16xf32> to vector<16x16xbf16>
    %cst_42 = arith.constant dense<0.000000e+00> : vector<16x16xf32>
    %140 = tpu.matmul %139, %125, %cst_42 {dimension_numbers = #tpu.dot_dimension_numbers<[1], [0], [0], [1], [0, 0, 1, 1], [], []>} : vector<16x16xbf16>, vector<16x16xbf16>, vector<16x16xf32> -> vector<16x16xf32>
    %141 = arith.truncf %140 : vector<16x16xf32> to vector<16x16xbf16>
    %142 = vector.extract_strided_slice %4 {offsets = [0, 112], sizes = [16, 16], strides = [1, 1]} : vector<16x128xbf16> to vector<16x16xbf16>
    %143 = vector.extract_strided_slice %6 {offsets = [0, 112], sizes = [16, 16], strides = [1, 1]} : vector<16x128xbf16> to vector<16x16xbf16>
    %144 = vector.extract_strided_slice %8 {offsets = [0, 112], sizes = [16, 16], strides = [1, 1]} : vector<16x128xbf16> to vector<16x16xbf16>
    %cst_43 = arith.constant dense<0.000000e+00> : vector<16x16xf32>
    %145 = tpu.matmul %142, %143, %cst_43 {dimension_numbers = #tpu.dot_dimension_numbers<[1], [1], [0], [0], [0, 0, 1, 0], [], []>} : vector<16x16xbf16>, vector<16x16xbf16>, vector<16x16xf32> -> vector<16x16xf32>
    %cst_44 = arith.constant 2.500000e-01 : f32
    %146 = vector.broadcast %cst_44 : f32 to vector<16x16xf32>
    %147 = arith.mulf %145, %146 : vector<16x16xf32>
    %cst_45 = arith.constant dense<0xFF800000> : vector<16xf32>
    %148 = vector.multi_reduction <maximumf>, %147, %cst_45 [1] : vector<16x16xf32> to vector<16xf32>
    %149 = vector.shape_cast %148 : vector<16xf32> to vector<16x1xf32>
    %150 = vector.broadcast %149 : vector<16x1xf32> to vector<16x16xf32>
    %151 = arith.subf %147, %150 : vector<16x16xf32>
    %152 = math.exp %151 : vector<16x16xf32>
    %cst_46 = arith.constant dense<0.000000e+00> : vector<16xf32>
    %153 = vector.multi_reduction <add>, %152, %cst_46 [1] : vector<16x16xf32> to vector<16xf32>
    %154 = vector.shape_cast %153 : vector<16xf32> to vector<16x1xf32>
    %155 = tpu.reciprocal %154 {approx = true} : vector<16x1xf32> -> vector<16x1xf32>
    %156 = vector.broadcast %155 : vector<16x1xf32> to vector<16x16xf32>
    %157 = arith.mulf %152, %156 : vector<16x16xf32>
    %158 = arith.truncf %157 : vector<16x16xf32> to vector<16x16xbf16>
    %cst_47 = arith.constant dense<0.000000e+00> : vector<16x16xf32>
    %159 = tpu.matmul %158, %144, %cst_47 {dimension_numbers = #tpu.dot_dimension_numbers<[1], [0], [0], [1], [0, 0, 1, 1], [], []>} : vector<16x16xbf16>, vector<16x16xbf16>, vector<16x16xf32> -> vector<16x16xf32>
    %160 = arith.truncf %159 : vector<16x16xf32> to vector<16x16xbf16>
    %161 = tpu.concatenate %27, %46, %65, %84, %103, %122, %141, %160 in 1 : vector<16x16xbf16>, vector<16x16xbf16>, vector<16x16xbf16>, vector<16x16xbf16>, vector<16x16xbf16>, vector<16x16xbf16>, vector<16x16xbf16>, vector<16x16xbf16> -> vector<16x128xbf16>
    %c0_48 = arith.constant 0 : index
    %c0_49 = arith.constant 0 : index
    %162 = vector.load %arg8[%c0_48, %c0_49] : memref<16x128xf32, #tpu.memory_space<vmem>>, vector<16x128xf32>
    %c0_50 = arith.constant 0 : index
    %c0_51 = arith.constant 0 : index
    %163 = vector.load %arg5[%c0_50, %c0_51] : memref<128x128xbf16, #tpu.memory_space<vmem>>, vector<128x128xbf16>
    %cst_52 = arith.constant dense<0.000000e+00> : vector<16x128xf32>
    %164 = tpu.matmul %161, %163, %cst_52 {dimension_numbers = #tpu.dot_dimension_numbers<[1], [0], [0], [1], [0, 0, 1, 1], [], []>} : vector<16x128xbf16>, vector<128x128xbf16>, vector<16x128xf32> -> vector<16x128xf32>
    %165 = arith.addf %162, %164 : vector<16x128xf32>
    %c0_53 = arith.constant 0 : index
    %c0_54 = arith.constant 0 : index
    %166 = vector.load %arg8[%c0_53, %c0_54] : memref<16x128xf32, #tpu.memory_space<vmem>>, vector<16x128xf32>
    tpu.vector_store %arg8[%c0_53, %c0_54], %165 {strides = array<i32>} : memref<16x128xf32, #tpu.memory_space<vmem>>, vector<16x128xf32>,
    %c0_i32_55 = arith.constant 0 : i32
    %167 = arith.cmpi eq, %arg1, %c0_i32_55 : i32
    %168 = arith.extui %167 : i1 to i32
    %c0_i32_56 = arith.constant 0 : i32
    %169 = arith.cmpi ne, %168, %c0_i32_56 : i32
    scf.if %169 {
      %c0_57 = arith.constant 0 : index
      %c0_58 = arith.constant 0 : index
      %170 = vector.load %arg8[%c0_57, %c0_58] : memref<16x128xf32, #tpu.memory_space<vmem>>, vector<16x128xf32>
      %c0_59 = arith.constant 0 : index
      %c0_60 = arith.constant 0 : index
      %171 = vector.load %arg6[%c0_59, %c0_60] : memref<1x128xbf16, #tpu.memory_space<vmem>>, vector<1x128xbf16>
      %172 = arith.extf %171 : vector<1x128xbf16> to vector<1x128xf32>
      %173 = vector.broadcast %172 : vector<1x128xf32> to vector<16x128xf32>
      %174 = arith.addf %170, %173 : vector<16x128xf32>
      %c0_61 = arith.constant 0 : index
      %c0_62 = arith.constant 0 : index
      %c0_63 = arith.constant 0 : index
      %175 = vector.load %arg7[%c0_61, %c0_62, %c0_63] : memref<1x16x128xf32, #tpu.memory_space<vmem>>, vector<1x16x128xf32>
      %176 = vector.shape_cast %175 : vector<1x16x128xf32> to vector<16x128xf32>
      %177 = vector.shape_cast %174 : vector<16x128xf32> to vector<1x16x128xf32>
      tpu.vector_store %arg7[%c0_61, %c0_62, %c0_63], %177 {strides = array<i32>} : memref<1x16x128xf32, #tpu.memory_space<vmem>>, vector<1x16x128xf32>,
    } else {
    }
    return
  }
  func.func @transform_0(%arg0: i32, %arg1: i32) -> (i32, i32, i32) {
    %c0_i32 = arith.constant 0 : i32
    %c0_i32_0 = arith.constant 0 : i32
    return %arg0, %c0_i32, %arg1 : i32, i32, i32
  }
  func.func @transform_1(%arg0: i32, %arg1: i32) -> (i32, i32, i32) {
    %c1_i32 = arith.constant 1 : i32
    %0 = arith.addi %arg1, %c1_i32 : i32
    %c0_i32 = arith.constant 0 : i32
    %c0_i32_0 = arith.constant 0 : i32
    return %arg0, %c0_i32, %0 : i32, i32, i32
  }
  func.func @transform_2(%arg0: i32, %arg1: i32) -> (i32, i32, i32) {
    %c2_i32 = arith.constant 2 : i32
    %0 = arith.addi %arg1, %c2_i32 : i32
    %c0_i32 = arith.constant 0 : i32
    %c0_i32_0 = arith.constant 0 : i32
    return %arg0, %c0_i32, %0 : i32, i32, i32
  }
  func.func @transform_3(%arg0: i32, %arg1: i32) -> (i32, i32) {
    %c0_i32 = arith.constant 0 : i32
    %c0_i32_0 = arith.constant 0 : i32
    return %arg1, %c0_i32 : i32, i32
  }
  func.func @transform_4(%arg0: i32, %arg1: i32) -> (i32, i32) {
    %c0_i32 = arith.constant 0 : i32
    %c0_i32_0 = arith.constant 0 : i32
    %c0_i32_1 = arith.constant 0 : i32
    return %c0_i32, %c0_i32_0 : i32, i32
  }
  func.func @transform_5(%arg0: i32, %arg1: i32) -> (i32, i32, i32) {
    %c0_i32 = arith.constant 0 : i32
    %c0_i32_0 = arith.constant 0 : i32
    %c0_i32_1 = arith.constant 0 : i32
    return %arg0, %c0_i32, %c0_i32_0 : i32, i32, i32
  }
}

</mosaic_0001>

<llo_original>
// kernel: attention_forward.2
$region0: #{attention_forward.2}
  #allocation0 [shape = 'u32[]', space=smem, size = 0x4, offset = 0x4, fixed_abs, tag = 'smem constant byte address 0x4 - core index']
  #allocation1 [shape = 'u32[72,128]{1,0:T(1,128)}', space=vmem, size = 0x9000, scoped, tag = 'internal scratch']
  %s0 = inlined_call_operand.vmem [shape: bf16[32,128], index: 0, kind: input, shape index: {}]
  %s1 = inlined_call_operand.hbm [shape: bf16[128,384], index: 1, kind: input, shape index: {}]
  %s2 = inlined_call_operand.vmem [shape: bf16[1,384], index: 2, kind: input, shape index: {}]
  %s3 = inlined_call_operand.vmem [shape: bf16[32,384], index: 3, kind: output, shape index: {}]
  %s4 = sld [smem:[#allocation0]]
  $region26: #{attention_forward.2} parent=0
    _
  %s6 = ssub.s32 1, %s4
  %s7 = scalar_select 0, %s6, %s4
  $region1: #{attention_forward.2} parent=0
    #allocation2 [shape = 'u8[98304]{0}', space=vmem, size = 0x18000, scoped, tag = 'input window, operand 1, single buffered']
    #allocation3 [shape = 's32[1]{0}', space=sflag, size = 0x4, scoped, tag = 'scoped memory for attention_forward.2']
    %8 = vsyncpa [#allocation3], 0
    // Predicated region
    $region2: #{attention_forward.2} parent=1 // pred_check
      _
    $region3: #{attention_forward.2} parent=1 // pred_check_branch
      %10 = sbr.rel (0) target = $region5
    $region4: #{attention_forward.2} parent=1 // pred_region
      _
    $region5: #{attention_forward.2} parent=1 // pred_fallthru
      _
    // Predicated region
    $region6: #{attention_forward.2} parent=1 // pred_check
      _
    $region7: #{attention_forward.2} parent=1 // pred_check_branch
      %12 = sbr.rel (0) target = $region9
    $region8: #{attention_forward.2} parent=1 // pred_region
      %14 = vsyncadd [#allocation3], 0
      %s15 = sshll.u32 %s1, 4
      %s16 = int_to_ptr.hbm [resolvable:$true] %s15
      %s17 = sshll.u32 [#allocation2], 4
      %s18 = int_to_ptr.vmem [resolvable:$true] %s17
      %23 = dma.hbm_to_vmem [thread:$0]  %s16, 3072, %s18, [#allocation3], 192, 192, 12
    $region9: #{attention_forward.2} parent=1 // pred_fallthru
      _
    // Predicated region
    $region10: #{attention_forward.2} parent=1 // pred_check
      _
    $region11: #{attention_forward.2} parent=1 // pred_check_branch
      %25 = sbr.rel (0) target = $region13
    $region12: #{attention_forward.2} parent=1 // pred_region
      _
    $region13: #{attention_forward.2} parent=1 // pred_fallthru
      _
    // Predicated region
    $region14: #{attention_forward.2} parent=1 // pred_check
      _
    $region15: #{attention_forward.2} parent=1 // pred_check_branch
      %27 = sbr.rel (0) target = $region17
    $region16: #{attention_forward.2} parent=1 // pred_region
      %29 = dma.done [#allocation3], 3072
    $region17: #{attention_forward.2} parent=1 // pred_fallthru
      _
    %v30 = vld [vmem:[%s0] sm:$0xf]
    %v31 = vld [vmem:[%s0 + $0x4] sm:$0xf]
    %v32 = vld [vmem:[%s0 + $0x8] sm:$0xf]
    %v33 = vld [vmem:[%s0 + $0xc] sm:$0xf]
    %v34 = vld [vmem:[#allocation2] sm:$0xff]
    %v35 = vld [vmem:[#allocation2 + $0x8] sm:$0xf]
    %v36 = vld [vmem:[#allocation2 + $0xc] sm:$0xff]
    %v37 = vld [vmem:[#allocation2 + $0x14] sm:$0xf]
    %v38 = vld [vmem:[#allocation2 + $0x18] sm:$0xff]
    %v39 = vld [vmem:[#allocation2 + $0x20] sm:$0xf]
    %v40 = vld [vmem:[#allocation2 + $0x24] sm:$0xff]
    %v41 = vld [vmem:[#allocation2 + $0x2c] sm:$0xf]
    %v42 = vld [vmem:[#allocation2 + $0x30] sm:$0xff]
    %v43 = vld [vmem:[#allocation2 + $0x38] sm:$0xf]
    %v44 = vld [vmem:[#allocation2 + $0x3c] sm:$0xff]
    %v45 = vld [vmem:[#allocation2 + $0x44] sm:$0xf]
    %v46 = vld [vmem:[#allocation2 + $0x48] sm:$0xff]
    %v47 = vld [vmem:[#allocation2 + $0x50] sm:$0xf]
    %v48 = vld [vmem:[#allocation2 + $0x54] sm:$0xff]
    %v49 = vld [vmem:[#allocation2 + $0x5c] sm:$0xf]
    %v50 = vld [vmem:[#allocation2 + $0x60] sm:$0xff]
    %v51 = vld [vmem:[#allocation2 + $0x68] sm:$0xf]
    %v52 = vld [vmem:[#allocation2 + $0x6c] sm:$0xff]
    %v53 = vld [vmem:[#allocation2 + $0x74] sm:$0xf]
    %v54 = vld [vmem:[#allocation2 + $0x78] sm:$0xff]
    %v55 = vld [vmem:[#allocation2 + $0x80] sm:$0xf]
    %v56 = vld [vmem:[#allocation2 + $0x84] sm:$0xff]
    %v57 = vld [vmem:[#allocation2 + $0x8c] sm:$0xf]
    %v58 = vld [vmem:[#allocation2 + $0x90] sm:$0xff]
    %v59 = vld [vmem:[#allocation2 + $0x98] sm:$0xf]
    %v60 = vld [vmem:[#allocation2 + $0x9c] sm:$0xff]
    %v61 = vld [vmem:[#allocation2 + $0xa4] sm:$0xf]
    %v62 = vld [vmem:[#allocation2 + $0xa8] sm:$0xff]
    %v63 = vld [vmem:[#allocation2 + $0xb0] sm:$0xf]
    %v64 = vld [vmem:[#allocation2 + $0xb4] sm:$0xff]
    %v65 = vld [vmem:[#allocation2 + $0xbc] sm:$0xf]
    %v66 = vld [vmem:[%s2] sm:$0x7]
    %v67 = vunpack.c.l.bf16 %v66
    %v69 = vperm.slane %v67, 0
    %v70 = vperm.slane %v67, 2
    %v71 = vperm.slane %v67, 4
    %v75 = vperm.slane %v69, 0
    %v76 = vperm.slane %v70, 0
    %v77 = vperm.slane %v71, 0
    %v82 = vunpack.c.l.b16 %v30
    %v83 = vunpack.c.l.b16 %v31
    %v84 = vunpack.c.l.b16 %v32
    %v85 = vunpack.c.l.b16 %v33
    %v86 = vpack.c.b16 %v83, %v82
    %v87 = vpack.c.b16 %v85, %v84
    %v122 = vunpack.c.l.b16 %v34
    %v123 = vunpack.c.h.b16 %v34
    %v124 = vunpack.c.l.b16 %v35
    %v125 = vunpack.c.l.b16 %v36
    %v126 = vunpack.c.h.b16 %v36
    %v127 = vunpack.c.l.b16 %v37
    %v128 = vunpack.c.l.b16 %v38
    %v129 = vunpack.c.h.b16 %v38
    %v130 = vunpack.c.l.b16 %v39
    %v131 = vunpack.c.l.b16 %v40
    %v132 = vunpack.c.h.b16 %v40
    %v133 = vunpack.c.l.b16 %v41
    %v134 = vunpack.c.l.b16 %v42
    %v135 = vunpack.c.h.b16 %v42
    %v136 = vunpack.c.l.b16 %v43
    %v137 = vunpack.c.l.b16 %v44
    %v138 = vunpack.c.h.b16 %v44
    %v139 = vunpack.c.l.b16 %v45
    %v140 = vunpack.c.l.b16 %v46
    %v141 = vunpack.c.h.b16 %v46
    %v142 = vunpack.c.l.b16 %v47
    %v143 = vunpack.c.l.b16 %v48
    %v144 = vunpack.c.h.b16 %v48
    %v145 = vunpack.c.l.b16 %v49
    %v146 = vunpack.c.l.b16 %v50
    %v147 = vunpack.c.h.b16 %v50
    %v148 = vunpack.c.l.b16 %v51
    %v149 = vunpack.c.l.b16 %v52
    %v150 = vunpack.c.h.b16 %v52
    %v151 = vunpack.c.l.b16 %v53
    %v152 = vunpack.c.l.b16 %v54
    %v153 = vunpack.c.h.b16 %v54
    %v154 = vunpack.c.l.b16 %v55
    %v155 = vunpack.c.l.b16 %v56
    %v156 = vunpack.c.h.b16 %v56
    %v157 = vunpack.c.l.b16 %v57
    %v158 = vunpack.c.l.b16 %v58
    %v159 = vunpack.c.h.b16 %v58
    %v160 = vunpack.c.l.b16 %v59
    %v161 = vunpack.c.l.b16 %v60
    %v162 = vunpack.c.h.b16 %v60
    %v163 = vunpack.c.l.b16 %v61
    %v164 = vunpack.c.l.b16 %v62
    %v165 = vunpack.c.h.b16 %v62
    %v166 = vunpack.c.l.b16 %v63
    %v167 = vunpack.c.l.b16 %v64
    %v168 = vunpack.c.h.b16 %v64
    %v169 = vunpack.c.l.b16 %v65
    %v170 = vpack.c.b16 %v125, %v122
    %v171 = vpack.c.b16 %v126, %v123
    %v172 = vpack.c.b16 %v127, %v124
    %v173 = vpack.c.b16 %v131, %v128
    %v174 = vpack.c.b16 %v132, %v129
    %v175 = vpack.c.b16 %v133, %v130
    %v176 = vpack.c.b16 %v137, %v134
    %v177 = vpack.c.b16 %v138, %v135
    %v178 = vpack.c.b16 %v139, %v136
    %v179 = vpack.c.b16 %v143, %v140
    %v180 = vpack.c.b16 %v144, %v141
    %v181 = vpack.c.b16 %v145, %v142
    %v182 = vpack.c.b16 %v149, %v146
    %v183 = vpack.c.b16 %v150, %v147
    %v184 = vpack.c.b16 %v151, %v148
    %v185 = vpack.c.b16 %v155, %v152
    %v186 = vpack.c.b16 %v156, %v153
    %v187 = vpack.c.b16 %v157, %v154
    %v188 = vpack.c.b16 %v161, %v158
    %v189 = vpack.c.b16 %v162, %v159
    %v190 = vpack.c.b16 %v163, %v160
    %v191 = vpack.c.b16 %v167, %v164
    %v192 = vpack.c.b16 %v168, %v165
    %v193 = vpack.c.b16 %v169, %v166
    %218 = vmatpush.bf16.msra.mxu0 %v191
    %219 = vmatpush.bf16.msra.mxu0 %v188
    %220 = vmatpush.bf16.msra.mxu0 %v185
    %221 = vmatpush.bf16.msra.mxu0 %v182
    %222 = vmatpush.bf16.msra.mxu0 %v179
    %223 = vmatpush.bf16.msra.mxu0 %v176
    %224 = vmatpush.bf16.msra.mxu0 %v173
    %225 = vmatpush.bf16.msra.mxu0 %v170
    %226 = vmatmul.bf16.gmra.mxu0 %v86
    %v227 = vpop.f32.mrf.mxu0
    %v228 = vadd.f32 %v75, %v227
    %v229 = vpop.f32.mrf.mxu0
    %v230 = vadd.f32 %v75, %v229
    %231 = vmatmul.bf16.gmra.mxu0 %v87
    %v232 = vpop.f32.mrf.mxu0
    %v233 = vadd.f32 %v75, %v232
    %v234 = vpop.f32.mrf.mxu0
    %v235 = vadd.f32 %v75, %v234
    %236 = vdwg.mxu0
    %237 = vmatpush.bf16.msra.mxu0 %v192
    %238 = vmatpush.bf16.msra.mxu0 %v189
    %239 = vmatpush.bf16.msra.mxu0 %v186
    %240 = vmatpush.bf16.msra.mxu0 %v183
    %241 = vmatpush.bf16.msra.mxu0 %v180
    %242 = vmatpush.bf16.msra.mxu0 %v177
    %243 = vmatpush.bf16.msra.mxu0 %v174
    %244 = vmatpush.bf16.msra.mxu0 %v171
    %245 = vmatmul.bf16.gmra.mxu0 %v86
    %v246 = vpop.f32.mrf.mxu0
    %v247 = vadd.f32 %v76, %v246
    %v248 = vpop.f32.mrf.mxu0
    %v249 = vadd.f32 %v76, %v248
    %250 = vmatmul.bf16.gmra.mxu0 %v87
    %v251 = vpop.f32.mrf.mxu0
    %v252 = vadd.f32 %v76, %v251
    %v253 = vpop.f32.mrf.mxu0
    %v254 = vadd.f32 %v76, %v253
    %255 = vdwg.mxu0
    %256 = vmatpush.bf16.msra.mxu0 %v193
    %257 = vmatpush.bf16.msra.mxu0 %v190
    %258 = vmatpush.bf16.msra.mxu0 %v187
    %259 = vmatpush.bf16.msra.mxu0 %v184
    %260 = vmatpush.bf16.msra.mxu0 %v181
    %261 = vmatpush.bf16.msra.mxu0 %v178
    %262 = vmatpush.bf16.msra.mxu0 %v175
    %263 = vmatpush.bf16.msra.mxu0 %v172
    %264 = vmatmul.bf16.gmra.mxu0 %v86
    %v265 = vpop.f32.mrf.mxu0
    %v266 = vadd.f32 %v77, %v265
    %v267 = vpop.f32.mrf.mxu0
    %v268 = vadd.f32 %v77, %v267
    %269 = vmatmul.bf16.gmra.mxu0 %v87
    %v270 = vpop.f32.mrf.mxu0
    %v271 = vadd.f32 %v77, %v270
    %v272 = vpop.f32.mrf.mxu0
    %v273 = vadd.f32 %v77, %v272
    %274 = vdwg.mxu0
    %v275 = vpack.c.bf16 %v247, %v228
    %v276 = vpack.c.bf16 %v266, %v266
    %v277 = vpack.c.bf16 %v249, %v230
    %v278 = vpack.c.bf16 %v268, %v268
    %v279 = vpack.c.bf16 %v252, %v233
    %v280 = vpack.c.bf16 %v271, %v271
    %v281 = vpack.c.bf16 %v254, %v235
    %v282 = vpack.c.bf16 %v273, %v273
    %283 = vst [vmem:[%s3] sm:$0xff] %v275
    %284 = vst [vmem:[%s3 + $0x8] sm:$0xf] %v276
    %285 = vst [vmem:[%s3 + $0xc] sm:$0xff] %v277
    %286 = vst [vmem:[%s3 + $0x14] sm:$0xf] %v278
    %287 = vst [vmem:[%s3 + $0x18] sm:$0xff] %v279
    %288 = vst [vmem:[%s3 + $0x20] sm:$0xf] %v280
    %289 = vst [vmem:[%s3 + $0x24] sm:$0xff] %v281
    %290 = vst [vmem:[%s3 + $0x2c] sm:$0xf] %v282
    // Predicated region
    $region18: #{attention_forward.2} parent=1 // pred_check
      _
    $region19: #{attention_forward.2} parent=1 // pred_check_branch
      %292 = sbr.rel (0) target = $region21
    $region20: #{attention_forward.2} parent=1 // pred_region
      _
    $region21: #{attention_forward.2} parent=1 // pred_fallthru
      _
    // Predicated region
    $region22: #{attention_forward.2} parent=1 // pred_check
      _
    $region23: #{attention_forward.2} parent=1 // pred_check_branch
      %294 = sbr.rel (0) target = $region25
    $region24: #{attention_forward.2} parent=1 // pred_region
      _
    $region25: #{attention_forward.2} parent=1 // pred_fallthru
      _
    %295 = vsyncpa [#allocation3], 1

// kernel: attention_forward.3
$region0: #{attention_forward.3}
  #allocation0 [shape = 'u32[]', space=smem, size = 0x4, offset = 0x4, fixed_abs, tag = 'smem constant byte address 0x4 - core index']
  #allocation1 [shape = 'u32[72,128]{1,0:T(1,128)}', space=vmem, size = 0x9000, scoped, tag = 'internal scratch']
  #allocation2 [shape = 'f32[16,128]{1,0:T(8,128)}', space=vmem, size = 0x2000, scoped, tag = 'scratch operand']
  %s0 = inlined_call_operand.vmem [shape: bf16[2,16,384], index: 0, kind: input, shape index: {}, may-alias: {0,1,2}]
  %s1 = inlined_call_operand.vmem [shape: bf16[2,16,384], index: 1, kind: input, shape index: {}, may-alias: {0,1,2}]
  %s2 = inlined_call_operand.vmem [shape: bf16[2,16,384], index: 2, kind: input, shape index: {}, may-alias: {0,1,2}]
  %s3 = inlined_call_operand.hbm [shape: bf16[128,128], index: 3, kind: input, shape index: {}]
  %s4 = inlined_call_operand.vmem [shape: bf16[1,128], index: 4, kind: input, shape index: {}]
  %s5 = inlined_call_operand.hbm [shape: f32[2,16,128], index: 5, kind: output, shape index: {}]
  %s6 = sld [smem:[#allocation0]]
  $region188: #{attention_forward.3} parent=0
    _
  %s8 = ssub.s32 1, %s6
  %s9 = scalar_select 0, %s8, %s6
  $region1: #{attention_forward.3} parent=0
    #allocation3 [shape = 'u8[8192]{0}', space=vmem, size = 0x2000, scoped, tag = 'input window, operand 0']
    #allocation4 [shape = 'u8[8192]{0}', space=vmem, size = 0x2000, scoped, tag = 'input window, operand 1']
    #allocation5 [shape = 'u8[8192]{0}', space=vmem, size = 0x2000, scoped, tag = 'input window, operand 2']
    #allocation6 [shape = 'u8[32768]{0}', space=vmem, size = 0x8000, scoped, tag = 'input window, operand 3, single buffered']
    #allocation7 [shape = 's32[2]{0}', space=sflag, size = 0x8, scoped, tag = 'scoped memory for attention_forward.3']
    #allocation8 [shape = 's32[2]{0}', space=sflag, size = 0x8, scoped, tag = 'scoped memory for attention_forward.3']
    #allocation9 [shape = 'u8[16384]{0}', space=vmem, size = 0x4000, scoped, tag = 'output window, operand 0']
    %10 = vsyncpa [#allocation7], 0
    %11 = vsyncpa [#allocation8], 0
    %s12 = scalar_lea.sflag [#allocation8], 1
    %13 = vsyncpa %s12, 0
    loop: start=0, step=1, limit=4
    $region2: #{attention_forward.3} parent=1 // loop_pre_header
      _
    $region3: #{attention_forward.3} parent=1 // loop_header
      %s15 = sphi 0, %s19
      %p16 = scmp.ge.s32.totalorder %s15, 4
      %s22 = sphi 0, %s34
      %s23 = sphi 0, %s30
      %s24 = sphi 0, %s22
      %s25 = sphi 0, %s23
      %s26 = sphi 0, %s24
      %s27 = sphi 0, %s25
      %s39 = sphi 0, %s41
      %s42 = sphi 0, %s39
      %s43 = sphi 0, %s42
      %s59 = sphi 0, %s43
      %s69 = sphi 0, %s71
      %s72 = sphi 0, %s69
      %s73 = sphi 0, %s72
      %s89 = sphi 0, %s73
      %s99 = sphi 0, %s101
      %s102 = sphi 0, %s99
      %s103 = sphi 0, %s102
      %s119 = sphi 0, %s103
      %s125 = sphi 0, %s127
      %s128 = sphi 0, %s125
      %s129 = sphi 0, %s128
      %s145 = sphi 0, %s129
      %s149 = sphi 0, %s149
      %s151 = sphi 0, %s149
      %s152 = sphi 0, %s151
      %s166 = sphi 0, %s152
      %s172 = sphi 0, %s174
      %s175 = sphi 0, %s172
      %s176 = sphi 0, %s175
      %s192 = sphi 0, %s176
    $region4: #{attention_forward.3} parent=1 // loop_header_branch
      %18 = sbr.rel (%p16) target = $region8
    $region5: #{attention_forward.3} parent=1 // loop_body
      %s20 = ssub.s32 %s15, 1
      %s21 = ssub.s32 %s15, 2
      %s28 = sadd.s32 1, %s23
      %p29 = scmp.ge.s32.totalorder %s28, 1
      %s30 = scalar_select %p29, 0, %s28
      %s31 = sadd.s32 1, %s22
      %s32 = scalar_select %p29, %s31, %s22
      %p33 = scmp.ge.s32.totalorder %s32, 2
      %s34 = scalar_select %p33, 0, %s32
      %s35 = ssub.s32 %s22, %s34
      %s36 = ssub.s32 %s23, %s30
      %s37 = sor.u32 %s35, %s36
      %p38 = scmp.eq.s32.totalorder %s37, 0
      %s40 = sadd.s32 %s39, 1
      %s41 = scalar_select %p38, %s39, %s40
      %p44 = pneg %p38
      %p45 = scmp.eq.s32.totalorder %s15, 1
      %p46 = por %p44, %p45
      %p47 = scmp.ne.s32.totalorder %s39, %s42
      %p48 = scmp.eq.s32.totalorder %s15, 0
      %p49 = por %p47, %p48
      %p50 = scmp.ne.s32.totalorder %s39, %s42
      %p51 = scmp.eq.s32.totalorder %s20, 1
      %p52 = por %p50, %p51
      %p53 = scmp.ne.s32.totalorder %s42, %s43
      %p54 = scmp.eq.s32.totalorder %s20, 0
      %p55 = por %p53, %p54
      %p56 = scmp.ne.s32.totalorder %s42, %s43
      %p57 = scmp.eq.s32.totalorder %s21, 1
      %p58 = por %p56, %p57
      %p60 = scmp.ne.s32.totalorder %s43, %s59
      %p61 = scmp.eq.s32.totalorder %s21, 0
      %p62 = por %p60, %p61
      %s63 = sadd.s32 %s23, 1
      %s64 = sadd.s32 %s30, 1
      %s65 = ssub.s32 %s22, %s34
      %s66 = ssub.s32 %s63, %s64
      %s67 = sor.u32 %s65, %s66
      %p68 = scmp.eq.s32.totalorder %s67, 0
      %s70 = sadd.s32 %s69, 1
      %s71 = scalar_select %p68, %s69, %s70
      %p74 = pneg %p68
      %p75 = scmp.eq.s32.totalorder %s15, 1
      %p76 = por %p74, %p75
      %p77 = scmp.ne.s32.totalorder %s69, %s72
      %p78 = scmp.eq.s32.totalorder %s15, 0
      %p79 = por %p77, %p78
      %p80 = scmp.ne.s32.totalorder %s69, %s72
      %p81 = scmp.eq.s32.totalorder %s20, 1
      %p82 = por %p80, %p81
      %p83 = scmp.ne.s32.totalorder %s72, %s73
      %p84 = scmp.eq.s32.totalorder %s20, 0
      %p85 = por %p83, %p84
      %p86 = scmp.ne.s32.totalorder %s72, %s73
      %p87 = scmp.eq.s32.totalorder %s21, 1
      %p88 = por %p86, %p87
      %p90 = scmp.ne.s32.totalorder %s73, %s89
      %p91 = scmp.eq.s32.totalorder %s21, 0
      %p92 = por %p90, %p91
      %s93 = sadd.s32 %s23, 2
      %s94 = sadd.s32 %s30, 2
      %s95 = ssub.s32 %s22, %s34
      %s96 = ssub.s32 %s93, %s94
      %s97 = sor.u32 %s95, %s96
      %p98 = scmp.eq.s32.totalorder %s97, 0
      %s100 = sadd.s32 %s99, 1
      %s101 = scalar_select %p98, %s99, %s100
      %p104 = pneg %p98
      %p105 = scmp.eq.s32.totalorder %s15, 1
      %p106 = por %p104, %p105
      %p107 = scmp.ne.s32.totalorder %s99, %s102
      %p108 = scmp.eq.s32.totalorder %s15, 0
      %p109 = por %p107, %p108
      %p110 = scmp.ne.s32.totalorder %s99, %s102
      %p111 = scmp.eq.s32.totalorder %s20, 1
      %p112 = por %p110, %p111
      %p113 = scmp.ne.s32.totalorder %s102, %s103
      %p114 = scmp.eq.s32.totalorder %s20, 0
      %p115 = por %p113, %p114
      %p116 = scmp.ne.s32.totalorder %s102, %s103
      %p117 = scmp.eq.s32.totalorder %s21, 1
      %p118 = por %p116, %p117
      %p120 = scmp.ne.s32.totalorder %s103, %s119
      %p121 = scmp.eq.s32.totalorder %s21, 0
      %p122 = por %p120, %p121
      %s123 = ssub.s32 %s23, %s30
      %p124 = scmp.eq.s32.totalorder %s123, 0
      %s126 = sadd.s32 %s125, 1
      %s127 = scalar_select %p124, %s125, %s126
      %p130 = pneg %p124
      %p131 = scmp.eq.s32.totalorder %s15, 1
      %p132 = por %p130, %p131
      %p133 = scmp.ne.s32.totalorder %s125, %s128
      %p134 = scmp.eq.s32.totalorder %s15, 0
      %p135 = por %p133, %p134
      %p136 = scmp.ne.s32.totalorder %s125, %s128
      %p137 = scmp.eq.s32.totalorder %s20, 1
      %p138 = por %p136, %p137
      %p139 = scmp.ne.s32.totalorder %s128, %s129
      %p140 = scmp.eq.s32.totalorder %s20, 0
      %p141 = por %p139, %p140
      %p142 = scmp.ne.s32.totalorder %s128, %s129
      %p143 = scmp.eq.s32.totalorder %s21, 1
      %p144 = por %p142, %p143
      %p146 = scmp.ne.s32.totalorder %s129, %s145
      %p147 = scmp.eq.s32.totalorder %s21, 0
      %p148 = por %p146, %p147
      %s150 = sadd.s32 %s149, 1
      %p153 = scmp.eq.s32.totalorder %s15, 1
      %p154 = scmp.ne.s32.totalorder %s149, %s151
      %p155 = scmp.eq.s32.totalorder %s15, 0
      %p156 = por %p154, %p155
      %p157 = scmp.ne.s32.totalorder %s149, %s151
      %p158 = scmp.eq.s32.totalorder %s20, 1
      %p159 = por %p157, %p158
      %p160 = scmp.ne.s32.totalorder %s151, %s152
      %p161 = scmp.eq.s32.totalorder %s20, 0
      %p162 = por %p160, %p161
      %p163 = scmp.ne.s32.totalorder %s151, %s152
      %p164 = scmp.eq.s32.totalorder %s21, 1
      %p165 = por %p163, %p164
      %p167 = scmp.ne.s32.totalorder %s152, %s166
      %p168 = scmp.eq.s32.totalorder %s21, 0
      %p169 = por %p167, %p168
      %s170 = ssub.s32 %s22, %s34
      %p171 = scmp.eq.s32.totalorder %s170, 0
      %s173 = sadd.s32 %s172, 1
      %s174 = scalar_select %p171, %s172, %s173
      %p177 = pneg %p171
      %p178 = scmp.eq.s32.totalorder %s15, 1
      %p179 = por %p177, %p178
      %p180 = scmp.ne.s32.totalorder %s172, %s175
      %p181 = scmp.eq.s32.totalorder %s15, 0
      %p182 = por %p180, %p181
      %p183 = scmp.ne.s32.totalorder %s172, %s175
      %p184 = scmp.eq.s32.totalorder %s20, 1
      %p185 = por %p183, %p184
      %p186 = scmp.ne.s32.totalorder %s175, %s176
      %p187 = scmp.eq.s32.totalorder %s20, 0
      %p188 = por %p186, %p187
      %p189 = scmp.ne.s32.totalorder %s175, %s176
      %p190 = scmp.eq.s32.totalorder %s21, 1
      %p191 = por %p189, %p190
      %p193 = scmp.ne.s32.totalorder %s176, %s192
      %p194 = scmp.eq.s32.totalorder %s21, 0
      %p195 = por %p193, %p194
      %p196 = scmp.le.s32.totalorder 1, %s15
      %p197 = scmp.lt.s32.totalorder %s15, 3
      %p198 = pnand %p196, %p197
      %p199 = pneg %p198
      // Predicated region
      $region9: #{attention_forward.3} parent=5 // pred_check
        _
      $region10: #{attention_forward.3} parent=5 // pred_check_branch
        %201 = sbr.rel (%p198) target = $region12
      $region11: #{attention_forward.3} parent=5 // pred_region
        %s202 = ssub.s32 %s15, 1
        // Predicated region
        $region13: #{attention_forward.3} parent=11 // pred_check
          %p203 = pneg %p141
        $region14: #{attention_forward.3} parent=11 // pred_check_branch
          %205 = sbr.rel (%p203) target = $region16
        $region15: #{attention_forward.3} parent=11 // pred_region
          %s206 = smul.u32 16, %s25
          %208 = vsyncadd [#allocation7], 0
          %s209 = smul.addr %s206, 4
          %s210 = scalar_lea.hbm %s3, %s209
          %s211 = sshll.u32 %s210, 4
          %s212 = int_to_ptr.hbm [resolvable:$true] %s211
          %s213 = sshll.u32 [#allocation6], 4
          %s214 = int_to_ptr.vmem [resolvable:$true] %s213
          %219 = dma.hbm_to_vmem [thread:$0]  %s212, 1024, %s214, [#allocation7], 64, 64, 4
        $region16: #{attention_forward.3} parent=11 // pred_fallthru
          _
        // Predicated region
        $region17: #{attention_forward.3} parent=11 // pred_check
          %p220 = pneg %p162
        $region18: #{attention_forward.3} parent=11 // pred_check_branch
          %222 = sbr.rel (%p220) target = $region20
        $region19: #{attention_forward.3} parent=11 // pred_region
          _
        $region20: #{attention_forward.3} parent=11 // pred_fallthru
          _
      $region12: #{attention_forward.3} parent=5 // pred_fallthru
        _
      %p223 = scmp.lt.s32.totalorder %s15, 2
      // Predicated region
      $region21: #{attention_forward.3} parent=5 // pred_check
        %p224 = pneg %p223
      $region22: #{attention_forward.3} parent=5 // pred_check_branch
        %226 = sbr.rel (%p224) target = $region24
      $region23: #{attention_forward.3} parent=5 // pred_region
        // Predicated region
        $region25: #{attention_forward.3} parent=23 // pred_check
          %p227 = pneg %p49
        $region26: #{attention_forward.3} parent=23 // pred_check_branch
          %229 = sbr.rel (%p227) target = $region28
        $region27: #{attention_forward.3} parent=23 // pred_region
          %s230 = sand.u32 %s39, 1
          %s231 = sand.u32 %s39, 1
          %s232 = smul.addr %s231, 8
          %s233 = scalar_lea.vmem [#allocation3], %s232
          %s234 = smul.addr %s22, 6
          %s235 = sadd.s32 %s23, %s234
          %s236 = smul.addr %s235, 4
          %s237 = scalar_lea.vmem %s0, %s236
          // Predicated region
          $region29: #{attention_forward.3} parent=27 // pred_check
            _
          $region30: #{attention_forward.3} parent=27 // pred_check_branch
            %239 = sbr.rel (0) target = $region32
          $region31: #{attention_forward.3} parent=27 // pred_region
            // Predicated region
            $region33: #{attention_forward.3} parent=31 // pred_check
              _
            $region34: #{attention_forward.3} parent=31 // pred_check_branch
              %241 = sbr.rel target = $region36
            $region35: #{attention_forward.3} parent=31 // pred_region
              // Predicated region
              $region48: #{attention_forward.3} parent=35 // pred_check
                _
              $region49: #{attention_forward.3} parent=35 // pred_check_branch
                %259 = sbr.rel (0) target = $region51
              $region50: #{attention_forward.3} parent=35 // pred_region
                loop: start=0, step=1, limit=1
                $region52: #{attention_forward.3} parent=50 // loop_pre_header
                  _
                $region53: #{attention_forward.3} parent=50 // loop_header
                  %s261 = sphi 0, %s265
                  %p262 = scmp.ge.s32.totalorder %s261, 1
                  %s266 = sphi %s237, %s237
                  %s267 = sphi %s233, %s233
                $region54: #{attention_forward.3} parent=50 // loop_header_branch
                  %264 = sbr.rel (%p262) target = $region58
                $region55: #{attention_forward.3} parent=50 // loop_body
                  _
                $region56: #{attention_forward.3} parent=50 // loop_footer
                  %s265 = sadd.s32 1, %s261
                $region57: #{attention_forward.3} parent=50 // loop_footer_branch
                  %260 = sbr.rel target = $region53
                $region58: #{attention_forward.3} parent=50 // loop_exit
                  _
                %s269 = ssub.s32 16, 1
                loop: start=0, step=1, limit=1
                $region59: #{attention_forward.3} parent=50 // loop_pre_header
                  _
                $region60: #{attention_forward.3} parent=50 // loop_header
                  %s271 = sphi 0, %s275
                  %p272 = scmp.ge.s32.totalorder %s271, 1
                  %s276 = sphi %s237, %s237
                  %s277 = sphi %s233, %s233
                $region61: #{attention_forward.3} parent=50 // loop_header_branch
                  %274 = sbr.rel (%p272) target = $region65
                $region62: #{attention_forward.3} parent=50 // loop_body
                  %v278 = vld [vmem:[%s276] sm:%s269]
                  %279 = vst [vmem:[%s277] sm:%s269] %v278
                  %v280 = vld [vmem:[%s276 + $0xc] sm:%s269]
                  %281 = vst [vmem:[%s277 + $0x4] sm:%s269] %v280
                $region63: #{attention_forward.3} parent=50 // loop_footer
                  %s275 = sadd.s32 1, %s271
                $region64: #{attention_forward.3} parent=50 // loop_footer_branch
                  %270 = sbr.rel target = $region60
                $region65: #{attention_forward.3} parent=50 // loop_exit
                  _
              $region51: #{attention_forward.3} parent=35 // pred_fallthru
                _
            $region36: #{attention_forward.3} parent=31 // pred_fallthru
              _
            // Predicated region
            $region37: #{attention_forward.3} parent=31 // pred_check
              _
            $region38: #{attention_forward.3} parent=31 // pred_check_branch
              %243 = sbr.rel (0) target = $region40
            $region39: #{attention_forward.3} parent=31 // pred_region
              %s245 = ssub.s32 16, 1
              loop: start=0, step=1, limit=1
              $region41: #{attention_forward.3} parent=39 // loop_pre_header
                _
              $region42: #{attention_forward.3} parent=39 // loop_header
                %s247 = sphi 0, %s251
                %p248 = scmp.ge.s32.totalorder %s247, 1
                %s252 = sphi %s237, %s237
                %s253 = sphi %s233, %s233
              $region43: #{attention_forward.3} parent=39 // loop_header_branch
                %250 = sbr.rel (%p248) target = $region47
              $region44: #{attention_forward.3} parent=39 // loop_body
                %v254 = vld [vmem:[%s252] sm:%s245]
                %255 = vst [vmem:[%s253] sm:%s245] %v254
                %v256 = vld [vmem:[%s252 + $0xc] sm:%s245]
                %257 = vst [vmem:[%s253 + $0x4] sm:%s245] %v256
              $region45: #{attention_forward.3} parent=39 // loop_footer
                %s251 = sadd.s32 1, %s247
              $region46: #{attention_forward.3} parent=39 // loop_footer_branch
                %246 = sbr.rel target = $region42
              $region47: #{attention_forward.3} parent=39 // loop_exit
                _
            $region40: #{attention_forward.3} parent=31 // pred_fallthru
              _
          $region32: #{attention_forward.3} parent=27 // pred_fallthru
            _
          %282 = vnop
        $region28: #{attention_forward.3} parent=23 // pred_fallthru
          _
        // Predicated region
        $region66: #{attention_forward.3} parent=23 // pred_check
          %p283 = pneg %p79
        $region67: #{attention_forward.3} parent=23 // pred_check_branch
          %285 = sbr.rel (%p283) target = $region69
        $region68: #{attention_forward.3} parent=23 // pred_region
          %s286 = sand.u32 %s69, 1
          %s287 = sand.u32 %s69, 1
          %s288 = smul.addr %s287, 8
          %s289 = scalar_lea.vmem [#allocation4], %s288
          %s290 = sadd.s32 %s23, 1
          %s291 = smul.addr %s22, 6
          %s292 = sadd.s32 %s290, %s291
          %s293 = smul.addr %s292, 4
          %s294 = scalar_lea.vmem %s1, %s293
          // Predicated region
          $region70: #{attention_forward.3} parent=68 // pred_check
            _
          $region71: #{attention_forward.3} parent=68 // pred_check_branch
            %296 = sbr.rel (0) target = $region73
          $region72: #{attention_forward.3} parent=68 // pred_region
            // Predicated region
            $region74: #{attention_forward.3} parent=72 // pred_check
              _
            $region75: #{attention_forward.3} parent=72 // pred_check_branch
              %298 = sbr.rel target = $region77
            $region76: #{attention_forward.3} parent=72 // pred_region
              // Predicated region
              $region89: #{attention_forward.3} parent=76 // pred_check
                _
              $region90: #{attention_forward.3} parent=76 // pred_check_branch
                %316 = sbr.rel (0) target = $region92
              $region91: #{attention_forward.3} parent=76 // pred_region
                loop: start=0, step=1, limit=1
                $region93: #{attention_forward.3} parent=91 // loop_pre_header
                  _
                $region94: #{attention_forward.3} parent=91 // loop_header
                  %s318 = sphi 0, %s322
                  %p319 = scmp.ge.s32.totalorder %s318, 1
                  %s323 = sphi %s294, %s294
                  %s324 = sphi %s289, %s289
                $region95: #{attention_forward.3} parent=91 // loop_header_branch
                  %321 = sbr.rel (%p319) target = $region99
                $region96: #{attention_forward.3} parent=91 // loop_body
                  _
                $region97: #{attention_forward.3} parent=91 // loop_footer
                  %s322 = sadd.s32 1, %s318
                $region98: #{attention_forward.3} parent=91 // loop_footer_branch
                  %317 = sbr.rel target = $region94
                $region99: #{attention_forward.3} parent=91 // loop_exit
                  _
                %s326 = ssub.s32 16, 1
                loop: start=0, step=1, limit=1
                $region100: #{attention_forward.3} parent=91 // loop_pre_header
                  _
                $region101: #{attention_forward.3} parent=91 // loop_header
                  %s328 = sphi 0, %s332
                  %p329 = scmp.ge.s32.totalorder %s328, 1
                  %s333 = sphi %s294, %s294
                  %s334 = sphi %s289, %s289
                $region102: #{attention_forward.3} parent=91 // loop_header_branch
                  %331 = sbr.rel (%p329) target = $region106
                $region103: #{attention_forward.3} parent=91 // loop_body
                  %v335 = vld [vmem:[%s333] sm:%s326]
                  %336 = vst [vmem:[%s334] sm:%s326] %v335
                  %v337 = vld [vmem:[%s333 + $0xc] sm:%s326]
                  %338 = vst [vmem:[%s334 + $0x4] sm:%s326] %v337
                $region104: #{attention_forward.3} parent=91 // loop_footer
                  %s332 = sadd.s32 1, %s328
                $region105: #{attention_forward.3} parent=91 // loop_footer_branch
                  %327 = sbr.rel target = $region101
                $region106: #{attention_forward.3} parent=91 // loop_exit
                  _
              $region92: #{attention_forward.3} parent=76 // pred_fallthru
                _
            $region77: #{attention_forward.3} parent=72 // pred_fallthru
              _
            // Predicated region
            $region78: #{attention_forward.3} parent=72 // pred_check
              _
            $region79: #{attention_forward.3} parent=72 // pred_check_branch
              %300 = sbr.rel (0) target = $region81
            $region80: #{attention_forward.3} parent=72 // pred_region
              %s302 = ssub.s32 16, 1
              loop: start=0, step=1, limit=1
              $region82: #{attention_forward.3} parent=80 // loop_pre_header
                _
              $region83: #{attention_forward.3} parent=80 // loop_header
                %s304 = sphi 0, %s308
                %p305 = scmp.ge.s32.totalorder %s304, 1
                %s309 = sphi %s294, %s294
                %s310 = sphi %s289, %s289
              $region84: #{attention_forward.3} parent=80 // loop_header_branch
                %307 = sbr.rel (%p305) target = $region88
              $region85: #{attention_forward.3} parent=80 // loop_body
                %v311 = vld [vmem:[%s309] sm:%s302]
                %312 = vst [vmem:[%s310] sm:%s302] %v311
                %v313 = vld [vmem:[%s309 + $0xc] sm:%s302]
                %314 = vst [vmem:[%s310 + $0x4] sm:%s302] %v313
              $region86: #{attention_forward.3} parent=80 // loop_footer
                %s308 = sadd.s32 1, %s304
              $region87: #{attention_forward.3} parent=80 // loop_footer_branch
                %303 = sbr.rel target = $region83
              $region88: #{attention_forward.3} parent=80 // loop_exit
                _
            $region81: #{attention_forward.3} parent=72 // pred_fallthru
              _
          $region73: #{attention_forward.3} parent=68 // pred_fallthru
            _
          %339 = vnop
        $region69: #{attention_forward.3} parent=23 // pred_fallthru
          _
        // Predicated region
        $region107: #{attention_forward.3} parent=23 // pred_check
          %p340 = pneg %p109
        $region108: #{attention_forward.3} parent=23 // pred_check_branch
          %342 = sbr.rel (%p340) target = $region110
        $region109: #{attention_forward.3} parent=23 // pred_region
          %s343 = sand.u32 %s99, 1
          %s344 = sand.u32 %s99, 1
          %s345 = smul.addr %s344, 8
          %s346 = scalar_lea.vmem [#allocation5], %s345
          %s347 = sadd.s32 %s23, 2
          %s348 = smul.addr %s22, 6
          %s349 = sadd.s32 %s347, %s348
          %s350 = smul.addr %s349, 4
          %s351 = scalar_lea.vmem %s2, %s350
          // Predicated region
          $region111: #{attention_forward.3} parent=109 // pred_check
            _
          $region112: #{attention_forward.3} parent=109 // pred_check_branch
            %353 = sbr.rel (0) target = $region114
          $region113: #{attention_forward.3} parent=109 // pred_region
            // Predicated region
            $region115: #{attention_forward.3} parent=113 // pred_check
              _
            $region116: #{attention_forward.3} parent=113 // pred_check_branch
              %355 = sbr.rel target = $region118
            $region117: #{attention_forward.3} parent=113 // pred_region
              // Predicated region
              $region130: #{attention_forward.3} parent=117 // pred_check
                _
              $region131: #{attention_forward.3} parent=117 // pred_check_branch
                %373 = sbr.rel (0) target = $region133
              $region132: #{attention_forward.3} parent=117 // pred_region
                loop: start=0, step=1, limit=1
                $region134: #{attention_forward.3} parent=132 // loop_pre_header
                  _
                $region135: #{attention_forward.3} parent=132 // loop_header
                  %s375 = sphi 0, %s379
                  %p376 = scmp.ge.s32.totalorder %s375, 1
                  %s380 = sphi %s351, %s351
                  %s381 = sphi %s346, %s346
                $region136: #{attention_forward.3} parent=132 // loop_header_branch
                  %378 = sbr.rel (%p376) target = $region140
                $region137: #{attention_forward.3} parent=132 // loop_body
                  _
                $region138: #{attention_forward.3} parent=132 // loop_footer
                  %s379 = sadd.s32 1, %s375
                $region139: #{attention_forward.3} parent=132 // loop_footer_branch
                  %374 = sbr.rel target = $region135
                $region140: #{attention_forward.3} parent=132 // loop_exit
                  _
                %s383 = ssub.s32 16, 1
                loop: start=0, step=1, limit=1
                $region141: #{attention_forward.3} parent=132 // loop_pre_header
                  _
                $region142: #{attention_forward.3} parent=132 // loop_header
                  %s385 = sphi 0, %s389
                  %p386 = scmp.ge.s32.totalorder %s385, 1
                  %s390 = sphi %s351, %s351
                  %s391 = sphi %s346, %s346
                $region143: #{attention_forward.3} parent=132 // loop_header_branch
                  %388 = sbr.rel (%p386) target = $region147
                $region144: #{attention_forward.3} parent=132 // loop_body
                  %v392 = vld [vmem:[%s390] sm:%s383]
                  %393 = vst [vmem:[%s391] sm:%s383] %v392
                  %v394 = vld [vmem:[%s390 + $0xc] sm:%s383]
                  %395 = vst [vmem:[%s391 + $0x4] sm:%s383] %v394
                $region145: #{attention_forward.3} parent=132 // loop_footer
                  %s389 = sadd.s32 1, %s385
                $region146: #{attention_forward.3} parent=132 // loop_footer_branch
                  %384 = sbr.rel target = $region142
                $region147: #{attention_forward.3} parent=132 // loop_exit
                  _
              $region133: #{attention_forward.3} parent=117 // pred_fallthru
                _
            $region118: #{attention_forward.3} parent=113 // pred_fallthru
              _
            // Predicated region
            $region119: #{attention_forward.3} parent=113 // pred_check
              _
            $region120: #{attention_forward.3} parent=113 // pred_check_branch
              %357 = sbr.rel (0) target = $region122
            $region121: #{attention_forward.3} parent=113 // pred_region
              %s359 = ssub.s32 16, 1
              loop: start=0, step=1, limit=1
              $region123: #{attention_forward.3} parent=121 // loop_pre_header
                _
              $region124: #{attention_forward.3} parent=121 // loop_header
                %s361 = sphi 0, %s365
                %p362 = scmp.ge.s32.totalorder %s361, 1
                %s366 = sphi %s351, %s351
                %s367 = sphi %s346, %s346
              $region125: #{attention_forward.3} parent=121 // loop_header_branch
                %364 = sbr.rel (%p362) target = $region129
              $region126: #{attention_forward.3} parent=121 // loop_body
                %v368 = vld [vmem:[%s366] sm:%s359]
                %369 = vst [vmem:[%s367] sm:%s359] %v368
                %v370 = vld [vmem:[%s366 + $0xc] sm:%s359]
                %371 = vst [vmem:[%s367 + $0x4] sm:%s359] %v370
              $region127: #{attention_forward.3} parent=121 // loop_footer
                %s365 = sadd.s32 1, %s361
              $region128: #{attention_forward.3} parent=121 // loop_footer_branch
                %360 = sbr.rel target = $region124
              $region129: #{attention_forward.3} parent=121 // loop_exit
                _
            $region122: #{attention_forward.3} parent=113 // pred_fallthru
              _
          $region114: #{attention_forward.3} parent=109 // pred_fallthru
            _
          %396 = vnop
        $region110: #{attention_forward.3} parent=23 // pred_fallthru
          _
      $region24: #{attention_forward.3} parent=5 // pred_fallthru
        _
      %p397 = scmp.le.s32.totalorder 1, %s15
      %p398 = scmp.lt.s32.totalorder %s15, 3
      %p399 = pnand %p397, %p398
      %p400 = pneg %p399
      // Predicated region
      $region148: #{attention_forward.3} parent=5 // pred_check
        _
      $region149: #{attention_forward.3} parent=5 // pred_check_branch
        %402 = sbr.rel (%p399) target = $region151
      $region150: #{attention_forward.3} parent=5 // pred_region
        %s403 = ssub.s32 %s15, 1
        %s404 = sand.u32 %s42, 1
        %s405 = sand.u32 %s42, 1
        %s406 = smul.addr %s405, 8
        %s407 = scalar_lea.vmem [#allocation3], %s406
        // Predicated region
        $region152: #{attention_forward.3} parent=150 // pred_check
          %p408 = pneg %p55
        $region153: #{attention_forward.3} parent=150 // pred_check_branch
          %410 = sbr.rel (%p408) target = $region155
        $region154: #{attention_forward.3} parent=150 // pred_region
          _
        $region155: #{attention_forward.3} parent=150 // pred_fallthru
          _
        %s411 = sand.u32 %s72, 1
        %s412 = sand.u32 %s72, 1
        %s413 = smul.addr %s412, 8
        %s414 = scalar_lea.vmem [#allocation4], %s413
        // Predicated region
        $region156: #{attention_forward.3} parent=150 // pred_check
          %p415 = pneg %p85
        $region157: #{attention_forward.3} parent=150 // pred_check_branch
          %417 = sbr.rel (%p415) target = $region159
        $region158: #{attention_forward.3} parent=150 // pred_region
          _
        $region159: #{attention_forward.3} parent=150 // pred_fallthru
          _
        %s418 = sand.u32 %s102, 1
        %s419 = sand.u32 %s102, 1
        %s420 = smul.addr %s419, 8
        %s421 = scalar_lea.vmem [#allocation5], %s420
        // Predicated region
        $region160: #{attention_forward.3} parent=150 // pred_check
          %p422 = pneg %p115
        $region161: #{attention_forward.3} parent=150 // pred_check_branch
          %424 = sbr.rel (%p422) target = $region163
        $region162: #{attention_forward.3} parent=150 // pred_region
          _
        $region163: #{attention_forward.3} parent=150 // pred_fallthru
          _
        // Predicated region
        $region164: #{attention_forward.3} parent=150 // pred_check
          %p425 = pneg %p141
        $region165: #{attention_forward.3} parent=150 // pred_check_branch
          %427 = sbr.rel (%p425) target = $region167
        $region166: #{attention_forward.3} parent=150 // pred_region
          %429 = dma.done [#allocation7], 1024
        $region167: #{attention_forward.3} parent=150 // pred_fallthru
          _
        %s430 = sand.u32 %s42, 1
        %s431 = sand.u32 %s42, 1
        %s432 = smul.addr %s431, 8
        %s433 = scalar_lea.vmem [#allocation3], %s432
        %p434 = pneg %p55
        %p435 = pneg %p52
        %s436 = sand.u32 %s72, 1
        %s437 = sand.u32 %s72, 1
        %s438 = smul.addr %s437, 8
        %s439 = scalar_lea.vmem [#allocation4], %s438
        %p440 = pneg %p85
        %p441 = pneg %p82
        %s442 = sand.u32 %s102, 1
        %s443 = sand.u32 %s102, 1
        %s444 = smul.addr %s443, 8
        %s445 = scalar_lea.vmem [#allocation5], %s444
        %p446 = pneg %p115
        %p447 = pneg %p112
        %p448 = pneg %p141
        %p449 = pneg %p138
        %p450 = pneg %p162
        %p451 = pneg %p159
        %p452 = pneg %p188
        %p453 = pneg %p185
        %s454 = sand.u32 %s175, 1
        %s455 = scalar_lea.sflag [#allocation8], %s454
        %s456 = sand.u32 %s175, 1
        %s457 = smul.addr %s456, 16
        %s458 = scalar_lea.vmem [#allocation9], %s457
        %s459 = sadd.s32 %s25, 1
        %s460 = sadd.s32 %s25, 2
        %s461 = smul.u32 16, %s25
        %p463 = scmp.eq.s32.totalorder %s25, 0
        // Predicated region
        $region168: #{attention_forward.3} parent=150 // pred_check
          %p464 = pneg %p463
        $region169: #{attention_forward.3} parent=150 // pred_check_branch
          %466 = sbr.rel (%p464) target = $region171
        $region170: #{attention_forward.3} parent=150 // pred_region
          %467 = vst [vmem:[#allocation2] sm:$0xff] 0.0
          %468 = vst [vmem:[#allocation2 + $0x8] sm:$0xff] 0.0
        $region171: #{attention_forward.3} parent=150 // pred_fallthru
          _
        %v469 = vld [vmem:[%s407] sm:$0xf]
        %v470 = vld [vmem:[%s407 + $0x4] sm:$0xf]
        %v471 = vld [vmem:[%s414] sm:$0xf]
        %v472 = vld [vmem:[%s414 + $0x4] sm:$0xf]
        %v473 = vld [vmem:[%s421] sm:$0xf]
        %v474 = vld [vmem:[%s421 + $0x4] sm:$0xf]
        %v477 = vunpack.c.l.b16 %v469
        %v478 = vunpack.c.l.b16 %v470
        %v479 = vpack.c.b16 %v478, %v477
        %v482 = vunpack.c.l.b16 %v471
        %v483 = vunpack.c.l.b16 %v472
        %v484 = vpack.c.b16 %v483, %v482
        %vm485 = vcmask 130048
        %v487 = vsel %vm485, %v479, 0
        %v490 = vsel %vm485, %v484, 0
        %492 = vmatpush.bf16.xpose.msra.mxu0 0
        %493 = vmatpush.bf16.xpose.msra.mxu0 0
        %494 = vmatpush.bf16.xpose.msra.mxu0 0
        %495 = vmatpush.bf16.xpose.msra.mxu0 0
        %496 = vmatpush.bf16.xpose.msra.mxu0 0
        %497 = vmatpush.bf16.xpose.msra.mxu0 0
        %498 = vmatpush.bf16.xpose.msra.mxu0 0
        %499 = vmatpush.bf16.xpose.msra.mxu0 %v490
        %500 = vmatmul.bf16.gmra.mxu0 %v487
        %v501 = vpop.f32.mrf.mxu0
        %v502 = vadd.f32 0.0, %v501
        %v503 = vpop.f32.mrf.mxu0
        %v504 = vadd.f32 0.0, %v503
        %505 = vdwg.mxu0
        %v506 = vmul.f32 %v502, 0.25
        %v507 = vmul.f32 %v504, 0.25
        %v508 = vsel %vm485, %v506, -inf
        %509 = vmax.xlane.f32.xlu0 %v508
        %v510 = vpop.xlane.xlu0 %509
        %v511 = vsel %vm485, %v507, -inf
        %512 = vmax.xlane.f32.xlu0 %v511
        %v513 = vpop.xlane.xlu0 %512
        %v514 = vsub.f32 %v506, %v510
        %v515 = vsub.f32 %v507, %v513
        %v516 = vmul.f32 %v514, 1.442695
        %v517 = vpow.pop %v516
        %v518 = vmul.f32 %v515, 1.442695
        %v519 = vpow.pop %v518
        %v520 = vsel %vm485, %v517, 0.0
        %521 = vadd.xlane.f32.xlu0 %v520
        %v522 = vpop.xlane.xlu0 %521
        %v523 = vsel %vm485, %v519, 0.0
        %524 = vadd.xlane.f32.xlu0 %v523
        %v525 = vpop.xlane.xlu0 %524
        %v526 = vrcp.pop %v522
        %v527 = vrcp.pop %v525
        %v528 = vmul.f32 %v517, %v526
        %v529 = vmul.f32 %v519, %v527
        %v530 = vpack.c.bf16 %v529, %v528
        %v533 = vunpack.c.l.b16 %v473
        %v534 = vunpack.c.l.b16 %v474
        %v535 = vpack.c.b16 %v534, %v533
        %v538 = vsel %vm485, %v530, 0
        %540 = vmatpush.bf16.msra.mxu0 0
        %541 = vmatpush.bf16.msra.mxu0 0
        %542 = vmatpush.bf16.msra.mxu0 0
        %543 = vmatpush.bf16.msra.mxu0 0
        %544 = vmatpush.bf16.msra.mxu0 0
        %545 = vmatpush.bf16.msra.mxu0 0
        %546 = vmatpush.bf16.msra.mxu0 0
        %547 = vmatpush.bf16.msra.mxu0 %v535
        %548 = vmatmul.bf16.gmra.mxu0 %v538
        %v549 = vpop.f32.mrf.mxu0
        %v550 = vadd.f32 0.0, %v549
        %v551 = vpop.f32.mrf.mxu0
        %v552 = vadd.f32 0.0, %v551
        %553 = vdwg.mxu0
        %v554 = vpack.c.bf16 %v550, %v550
        %v555 = vpack.c.bf16 %v552, %v552
        %556 = vrot.lane.b32.xlu0 %v479, 112
        %v557 = vpop.permute.xlu0 %556
        %558 = vrot.lane.b32.xlu0 %v484, 112
        %v559 = vpop.permute.xlu0 %558
        %v561 = vsel %vm485, %v557, 0
        %v564 = vsel %vm485, %v559, 0
        %566 = vmatpush.bf16.xpose.msra.mxu0 0
        %567 = vmatpush.bf16.xpose.msra.mxu0 0
        %568 = vmatpush.bf16.xpose.msra.mxu0 0
        %569 = vmatpush.bf16.xpose.msra.mxu0 0
        %570 = vmatpush.bf16.xpose.msra.mxu0 0
        %571 = vmatpush.bf16.xpose.msra.mxu0 0
        %572 = vmatpush.bf16.xpose.msra.mxu0 0
        %573 = vmatpush.bf16.xpose.msra.mxu0 %v564
        %574 = vmatmul.bf16.gmra.mxu0 %v561
        %v575 = vpop.f32.mrf.mxu0
        %v576 = vadd.f32 0.0, %v575
        %v577 = vpop.f32.mrf.mxu0
        %v578 = vadd.f32 0.0, %v577
        %579 = vdwg.mxu0
        %v580 = vmul.f32 %v576, 0.25
        %v581 = vmul.f32 %v578, 0.25
        %v582 = vsel %vm485, %v580, -inf
        %583 = vmax.xlane.f32.xlu0 %v582
        %v584 = vpop.xlane.xlu0 %583
        %v585 = vsel %vm485, %v581, -inf
        %586 = vmax.xlane.f32.xlu0 %v585
        %v587 = vpop.xlane.xlu0 %586
        %v588 = vsub.f32 %v580, %v584
        %v589 = vsub.f32 %v581, %v587
        %v590 = vmul.f32 %v588, 1.442695
        %v591 = vpow.pop %v590
        %v592 = vmul.f32 %v589, 1.442695
        %v593 = vpow.pop %v592
        %v594 = vsel %vm485, %v591, 0.0
        %595 = vadd.xlane.f32.xlu0 %v594
        %v596 = vpop.xlane.xlu0 %595
        %v597 = vsel %vm485, %v593, 0.0
        %598 = vadd.xlane.f32.xlu0 %v597
        %v599 = vpop.xlane.xlu0 %598
        %v600 = vrcp.pop %v596
        %v601 = vrcp.pop %v599
        %v602 = vmul.f32 %v591, %v600
        %v603 = vmul.f32 %v593, %v601
        %v604 = vpack.c.bf16 %v603, %v602
        %605 = vrot.lane.b32.xlu0 %v535, 112
        %v606 = vpop.permute.xlu0 %605
        %v609 = vsel %vm485, %v604, 0
        %611 = vmatpush.bf16.msra.mxu0 0
        %612 = vmatpush.bf16.msra.mxu0 0
        %613 = vmatpush.bf16.msra.mxu0 0
        %614 = vmatpush.bf16.msra.mxu0 0
        %615 = vmatpush.bf16.msra.mxu0 0
        %616 = vmatpush.bf16.msra.mxu0 0
        %617 = vmatpush.bf16.msra.mxu0 0
        %618 = vmatpush.bf16.msra.mxu0 %v606
        %619 = vmatmul.bf16.gmra.mxu0 %v609
        %v620 = vpop.f32.mrf.mxu0
        %v621 = vadd.f32 0.0, %v620
        %v622 = vpop.f32.mrf.mxu0
        %v623 = vadd.f32 0.0, %v622
        %624 = vdwg.mxu0
        %v625 = vpack.c.bf16 %v621, %v621
        %v626 = vpack.c.bf16 %v623, %v623
        %627 = vrot.lane.b32.xlu0 %v479, 96
        %v628 = vpop.permute.xlu0 %627
        %629 = vrot.lane.b32.xlu0 %v484, 96
        %v630 = vpop.permute.xlu0 %629
        %v632 = vsel %vm485, %v628, 0
        %v635 = vsel %vm485, %v630, 0
        %637 = vmatpush.bf16.xpose.msra.mxu0 0
        %638 = vmatpush.bf16.xpose.msra.mxu0 0
        %639 = vmatpush.bf16.xpose.msra.mxu0 0
        %640 = vmatpush.bf16.xpose.msra.mxu0 0
        %641 = vmatpush.bf16.xpose.msra.mxu0 0
        %642 = vmatpush.bf16.xpose.msra.mxu0 0
        %643 = vmatpush.bf16.xpose.msra.mxu0 0
        %644 = vmatpush.bf16.xpose.msra.mxu0 %v635
        %645 = vmatmul.bf16.gmra.mxu0 %v632
        %v646 = vpop.f32.mrf.mxu0
        %v647 = vadd.f32 0.0, %v646
        %v648 = vpop.f32.mrf.mxu0
        %v649 = vadd.f32 0.0, %v648
        %650 = vdwg.mxu0
        %v651 = vmul.f32 %v647, 0.25
        %v652 = vmul.f32 %v649, 0.25
        %v653 = vsel %vm485, %v651, -inf
        %654 = vmax.xlane.f32.xlu0 %v653
        %v655 = vpop.xlane.xlu0 %654
        %v656 = vsel %vm485, %v652, -inf
        %657 = vmax.xlane.f32.xlu0 %v656
        %v658 = vpop.xlane.xlu0 %657
        %v659 = vsub.f32 %v651, %v655
        %v660 = vsub.f32 %v652, %v658
        %v661 = vmul.f32 %v659, 1.442695
        %v662 = vpow.pop %v661
        %v663 = vmul.f32 %v660, 1.442695
        %v664 = vpow.pop %v663
        %v665 = vsel %vm485, %v662, 0.0
        %666 = vadd.xlane.f32.xlu0 %v665
        %v667 = vpop.xlane.xlu0 %666
        %v668 = vsel %vm485, %v664, 0.0
        %669 = vadd.xlane.f32.xlu0 %v668
        %v670 = vpop.xlane.xlu0 %669
        %v671 = vrcp.pop %v667
        %v672 = vrcp.pop %v670
        %v673 = vmul.f32 %v662, %v671
        %v674 = vmul.f32 %v664, %v672
        %v675 = vpack.c.bf16 %v674, %v673
        %676 = vrot.lane.b32.xlu0 %v535, 96
        %v677 = vpop.permute.xlu0 %676
        %v680 = vsel %vm485, %v675, 0
        %682 = vmatpush.bf16.msra.mxu0 0
        %683 = vmatpush.bf16.msra.mxu0 0
        %684 = vmatpush.bf16.msra.mxu0 0
        %685 = vmatpush.bf16.msra.mxu0 0
        %686 = vmatpush.bf16.msra.mxu0 0
        %687 = vmatpush.bf16.msra.mxu0 0
        %688 = vmatpush.bf16.msra.mxu0 0
        %689 = vmatpush.bf16.msra.mxu0 %v677
        %690 = vmatmul.bf16.gmra.mxu0 %v680
        %v691 = vpop.f32.mrf.mxu0
        %v692 = vadd.f32 0.0, %v691
        %v693 = vpop.f32.mrf.mxu0
        %v694 = vadd.f32 0.0, %v693
        %695 = vdwg.mxu0
        %v696 = vpack.c.bf16 %v692, %v692
        %v697 = vpack.c.bf16 %v694, %v694
        %698 = vrot.lane.b32.xlu0 %v479, 80
        %v699 = vpop.permute.xlu0 %698
        %700 = vrot.lane.b32.xlu0 %v484, 80
        %v701 = vpop.permute.xlu0 %700
        %v703 = vsel %vm485, %v699, 0
        %v706 = vsel %vm485, %v701, 0
        %708 = vmatpush.bf16.xpose.msra.mxu0 0
        %709 = vmatpush.bf16.xpose.msra.mxu0 0
        %710 = vmatpush.bf16.xpose.msra.mxu0 0
        %711 = vmatpush.bf16.xpose.msra.mxu0 0
        %712 = vmatpush.bf16.xpose.msra.mxu0 0
        %713 = vmatpush.bf16.xpose.msra.mxu0 0
        %714 = vmatpush.bf16.xpose.msra.mxu0 0
        %715 = vmatpush.bf16.xpose.msra.mxu0 %v706
        %716 = vmatmul.bf16.gmra.mxu0 %v703
        %v717 = vpop.f32.mrf.mxu0
        %v718 = vadd.f32 0.0, %v717
        %v719 = vpop.f32.mrf.mxu0
        %v720 = vadd.f32 0.0, %v719
        %721 = vdwg.mxu0
        %v722 = vmul.f32 %v718, 0.25
        %v723 = vmul.f32 %v720, 0.25
        %v724 = vsel %vm485, %v722, -inf
        %725 = vmax.xlane.f32.xlu0 %v724
        %v726 = vpop.xlane.xlu0 %725
        %v727 = vsel %vm485, %v723, -inf
        %728 = vmax.xlane.f32.xlu0 %v727
        %v729 = vpop.xlane.xlu0 %728
        %v730 = vsub.f32 %v722, %v726
        %v731 = vsub.f32 %v723, %v729
        %v732 = vmul.f32 %v730, 1.442695
        %v733 = vpow.pop %v732
        %v734 = vmul.f32 %v731, 1.442695
        %v735 = vpow.pop %v734
        %v736 = vsel %vm485, %v733, 0.0
        %737 = vadd.xlane.f32.xlu0 %v736
        %v738 = vpop.xlane.xlu0 %737
        %v739 = vsel %vm485, %v735, 0.0
        %740 = vadd.xlane.f32.xlu0 %v739
        %v741 = vpop.xlane.xlu0 %740
        %v742 = vrcp.pop %v738
        %v743 = vrcp.pop %v741
        %v744 = vmul.f32 %v733, %v742
        %v745 = vmul.f32 %v735, %v743
        %v746 = vpack.c.bf16 %v745, %v744
        %747 = vrot.lane.b32.xlu0 %v535, 80
        %v748 = vpop.permute.xlu0 %747
        %v751 = vsel %vm485, %v746, 0
        %753 = vmatpush.bf16.msra.mxu0 0
        %754 = vmatpush.bf16.msra.mxu0 0
        %755 = vmatpush.bf16.msra.mxu0 0
        %756 = vmatpush.bf16.msra.mxu0 0
        %757 = vmatpush.bf16.msra.mxu0 0
        %758 = vmatpush.bf16.msra.mxu0 0
        %759 = vmatpush.bf16.msra.mxu0 0
        %760 = vmatpush.bf16.msra.mxu0 %v748
        %761 = vmatmul.bf16.gmra.mxu0 %v751
        %v762 = vpop.f32.mrf.mxu0
        %v763 = vadd.f32 0.0, %v762
        %v764 = vpop.f32.mrf.mxu0
        %v765 = vadd.f32 0.0, %v764
        %766 = vdwg.mxu0
        %v767 = vpack.c.bf16 %v763, %v763
        %v768 = vpack.c.bf16 %v765, %v765
        %769 = vrot.lane.b32.xlu0 %v479, 64
        %v770 = vpop.permute.xlu0 %769
        %771 = vrot.lane.b32.xlu0 %v484, 64
        %v772 = vpop.permute.xlu0 %771
        %v774 = vsel %vm485, %v770, 0
        %v777 = vsel %vm485, %v772, 0
        %779 = vmatpush.bf16.xpose.msra.mxu0 0
        %780 = vmatpush.bf16.xpose.msra.mxu0 0
        %781 = vmatpush.bf16.xpose.msra.mxu0 0
        %782 = vmatpush.bf16.xpose.msra.mxu0 0
        %783 = vmatpush.bf16.xpose.msra.mxu0 0
        %784 = vmatpush.bf16.xpose.msra.mxu0 0
        %785 = vmatpush.bf16.xpose.msra.mxu0 0
        %786 = vmatpush.bf16.xpose.msra.mxu0 %v777
        %787 = vmatmul.bf16.gmra.mxu0 %v774
        %v788 = vpop.f32.mrf.mxu0
        %v789 = vadd.f32 0.0, %v788
        %v790 = vpop.f32.mrf.mxu0
        %v791 = vadd.f32 0.0, %v790
        %792 = vdwg.mxu0
        %v793 = vmul.f32 %v789, 0.25
        %v794 = vmul.f32 %v791, 0.25
        %v795 = vsel %vm485, %v793, -inf
        %796 = vmax.xlane.f32.xlu0 %v795
        %v797 = vpop.xlane.xlu0 %796
        %v798 = vsel %vm485, %v794, -inf
        %799 = vmax.xlane.f32.xlu0 %v798
        %v800 = vpop.xlane.xlu0 %799
        %v801 = vsub.f32 %v793, %v797
        %v802 = vsub.f32 %v794, %v800
        %v803 = vmul.f32 %v801, 1.442695
        %v804 = vpow.pop %v803
        %v805 = vmul.f32 %v802, 1.442695
        %v806 = vpow.pop %v805
        %v807 = vsel %vm485, %v804, 0.0
        %808 = vadd.xlane.f32.xlu0 %v807
        %v809 = vpop.xlane.xlu0 %808
        %v810 = vsel %vm485, %v806, 0.0
        %811 = vadd.xlane.f32.xlu0 %v810
        %v812 = vpop.xlane.xlu0 %811
        %v813 = vrcp.pop %v809
        %v814 = vrcp.pop %v812
        %v815 = vmul.f32 %v804, %v813
        %v816 = vmul.f32 %v806, %v814
        %v817 = vpack.c.bf16 %v816, %v815
        %818 = vrot.lane.b32.xlu0 %v535, 64
        %v819 = vpop.permute.xlu0 %818
        %v822 = vsel %vm485, %v817, 0
        %824 = vmatpush.bf16.msra.mxu0 0
        %825 = vmatpush.bf16.msra.mxu0 0
        %826 = vmatpush.bf16.msra.mxu0 0
        %827 = vmatpush.bf16.msra.mxu0 0
        %828 = vmatpush.bf16.msra.mxu0 0
        %829 = vmatpush.bf16.msra.mxu0 0
        %830 = vmatpush.bf16.msra.mxu0 0
        %831 = vmatpush.bf16.msra.mxu0 %v819
        %832 = vmatmul.bf16.gmra.mxu0 %v822
        %v833 = vpop.f32.mrf.mxu0
        %v834 = vadd.f32 0.0, %v833
        %v835 = vpop.f32.mrf.mxu0
        %v836 = vadd.f32 0.0, %v835
        %837 = vdwg.mxu0
        %v838 = vpack.c.bf16 %v834, %v834
        %v839 = vpack.c.bf16 %v836, %v836
        %840 = vrot.lane.b32.xlu0 %v479, 48
        %v841 = vpop.permute.xlu0 %840
        %842 = vrot.lane.b32.xlu0 %v484, 48
        %v843 = vpop.permute.xlu0 %842
        %v845 = vsel %vm485, %v841, 0
        %v848 = vsel %vm485, %v843, 0
        %850 = vmatpush.bf16.xpose.msra.mxu0 0
        %851 = vmatpush.bf16.xpose.msra.mxu0 0
        %852 = vmatpush.bf16.xpose.msra.mxu0 0
        %853 = vmatpush.bf16.xpose.msra.mxu0 0
        %854 = vmatpush.bf16.xpose.msra.mxu0 0
        %855 = vmatpush.bf16.xpose.msra.mxu0 0
        %856 = vmatpush.bf16.xpose.msra.mxu0 0
        %857 = vmatpush.bf16.xpose.msra.mxu0 %v848
        %858 = vmatmul.bf16.gmra.mxu0 %v845
        %v859 = vpop.f32.mrf.mxu0
        %v860 = vadd.f32 0.0, %v859
        %v861 = vpop.f32.mrf.mxu0
        %v862 = vadd.f32 0.0, %v861
        %863 = vdwg.mxu0
        %v864 = vmul.f32 %v860, 0.25
        %v865 = vmul.f32 %v862, 0.25
        %v866 = vsel %vm485, %v864, -inf
        %867 = vmax.xlane.f32.xlu0 %v866
        %v868 = vpop.xlane.xlu0 %867
        %v869 = vsel %vm485, %v865, -inf
        %870 = vmax.xlane.f32.xlu0 %v869
        %v871 = vpop.xlane.xlu0 %870
        %v872 = vsub.f32 %v864, %v868
        %v873 = vsub.f32 %v865, %v871
        %v874 = vmul.f32 %v872, 1.442695
        %v875 = vpow.pop %v874
        %v876 = vmul.f32 %v873, 1.442695
        %v877 = vpow.pop %v876
        %v878 = vsel %vm485, %v875, 0.0
        %879 = vadd.xlane.f32.xlu0 %v878
        %v880 = vpop.xlane.xlu0 %879
        %v881 = vsel %vm485, %v877, 0.0
        %882 = vadd.xlane.f32.xlu0 %v881
        %v883 = vpop.xlane.xlu0 %882
        %v884 = vrcp.pop %v880
        %v885 = vrcp.pop %v883
        %v886 = vmul.f32 %v875, %v884
        %v887 = vmul.f32 %v877, %v885
        %v888 = vpack.c.bf16 %v887, %v886
        %889 = vrot.lane.b32.xlu0 %v535, 48
        %v890 = vpop.permute.xlu0 %889
        %v893 = vsel %vm485, %v888, 0
        %895 = vmatpush.bf16.msra.mxu0 0
        %896 = vmatpush.bf16.msra.mxu0 0
        %897 = vmatpush.bf16.msra.mxu0 0
        %898 = vmatpush.bf16.msra.mxu0 0
        %899 = vmatpush.bf16.msra.mxu0 0
        %900 = vmatpush.bf16.msra.mxu0 0
        %901 = vmatpush.bf16.msra.mxu0 0
        %902 = vmatpush.bf16.msra.mxu0 %v890
        %903 = vmatmul.bf16.gmra.mxu0 %v893
        %v904 = vpop.f32.mrf.mxu0
        %v905 = vadd.f32 0.0, %v904
        %v906 = vpop.f32.mrf.mxu0
        %v907 = vadd.f32 0.0, %v906
        %908 = vdwg.mxu0
        %v909 = vpack.c.bf16 %v905, %v905
        %v910 = vpack.c.bf16 %v907, %v907
        %911 = vrot.lane.b32.xlu0 %v479, 32
        %v912 = vpop.permute.xlu0 %911
        %913 = vrot.lane.b32.xlu0 %v484, 32
        %v914 = vpop.permute.xlu0 %913
        %v916 = vsel %vm485, %v912, 0
        %v919 = vsel %vm485, %v914, 0
        %921 = vmatpush.bf16.xpose.msra.mxu0 0
        %922 = vmatpush.bf16.xpose.msra.mxu0 0
        %923 = vmatpush.bf16.xpose.msra.mxu0 0
        %924 = vmatpush.bf16.xpose.msra.mxu0 0
        %925 = vmatpush.bf16.xpose.msra.mxu0 0
        %926 = vmatpush.bf16.xpose.msra.mxu0 0
        %927 = vmatpush.bf16.xpose.msra.mxu0 0
        %928 = vmatpush.bf16.xpose.msra.mxu0 %v919
        %929 = vmatmul.bf16.gmra.mxu0 %v916
        %v930 = vpop.f32.mrf.mxu0
        %v931 = vadd.f32 0.0, %v930
        %v932 = vpop.f32.mrf.mxu0
        %v933 = vadd.f32 0.0, %v932
        %934 = vdwg.mxu0
        %v935 = vmul.f32 %v931, 0.25
        %v936 = vmul.f32 %v933, 0.25
        %v937 = vsel %vm485, %v935, -inf
        %938 = vmax.xlane.f32.xlu0 %v937
        %v939 = vpop.xlane.xlu0 %938
        %v940 = vsel %vm485, %v936, -inf
        %941 = vmax.xlane.f32.xlu0 %v940
        %v942 = vpop.xlane.xlu0 %941
        %v943 = vsub.f32 %v935, %v939
        %v944 = vsub.f32 %v936, %v942
        %v945 = vmul.f32 %v943, 1.442695
        %v946 = vpow.pop %v945
        %v947 = vmul.f32 %v944, 1.442695
        %v948 = vpow.pop %v947
        %v949 = vsel %vm485, %v946, 0.0
        %950 = vadd.xlane.f32.xlu0 %v949
        %v951 = vpop.xlane.xlu0 %950
        %v952 = vsel %vm485, %v948, 0.0
        %953 = vadd.xlane.f32.xlu0 %v952
        %v954 = vpop.xlane.xlu0 %953
        %v955 = vrcp.pop %v951
        %v956 = vrcp.pop %v954
        %v957 = vmul.f32 %v946, %v955
        %v958 = vmul.f32 %v948, %v956
        %v959 = vpack.c.bf16 %v958, %v957
        %960 = vrot.lane.b32.xlu0 %v535, 32
        %v961 = vpop.permute.xlu0 %960
        %v964 = vsel %vm485, %v959, 0
        %966 = vmatpush.bf16.msra.mxu0 0
        %967 = vmatpush.bf16.msra.mxu0 0
        %968 = vmatpush.bf16.msra.mxu0 0
        %969 = vmatpush.bf16.msra.mxu0 0
        %970 = vmatpush.bf16.msra.mxu0 0
        %971 = vmatpush.bf16.msra.mxu0 0
        %972 = vmatpush.bf16.msra.mxu0 0
        %973 = vmatpush.bf16.msra.mxu0 %v961
        %974 = vmatmul.bf16.gmra.mxu0 %v964
        %v975 = vpop.f32.mrf.mxu0
        %v976 = vadd.f32 0.0, %v975
        %v977 = vpop.f32.mrf.mxu0
        %v978 = vadd.f32 0.0, %v977
        %979 = vdwg.mxu0
        %v980 = vpack.c.bf16 %v976, %v976
        %v981 = vpack.c.bf16 %v978, %v978
        %982 = vrot.lane.b32.xlu0 %v479, 16
        %v983 = vpop.permute.xlu0 %982
        %984 = vrot.lane.b32.xlu0 %v484, 16
        %v985 = vpop.permute.xlu0 %984
        %v987 = vsel %vm485, %v983, 0
        %v990 = vsel %vm485, %v985, 0
        %992 = vmatpush.bf16.xpose.msra.mxu0 0
        %993 = vmatpush.bf16.xpose.msra.mxu0 0
        %994 = vmatpush.bf16.xpose.msra.mxu0 0
        %995 = vmatpush.bf16.xpose.msra.mxu0 0
        %996 = vmatpush.bf16.xpose.msra.mxu0 0
        %997 = vmatpush.bf16.xpose.msra.mxu0 0
        %998 = vmatpush.bf16.xpose.msra.mxu0 0
        %999 = vmatpush.bf16.xpose.msra.mxu0 %v990
        %1000 = vmatmul.bf16.gmra.mxu0 %v987
        %v1001 = vpop.f32.mrf.mxu0
        %v1002 = vadd.f32 0.0, %v1001
        %v1003 = vpop.f32.mrf.mxu0
        %v1004 = vadd.f32 0.0, %v1003
        %1005 = vdwg.mxu0
        %v1006 = vmul.f32 %v1002, 0.25
        %v1007 = vmul.f32 %v1004, 0.25
        %v1008 = vsel %vm485, %v1006, -inf
        %1009 = vmax.xlane.f32.xlu0 %v1008
        %v1010 = vpop.xlane.xlu0 %1009
        %v1011 = vsel %vm485, %v1007, -inf
        %1012 = vmax.xlane.f32.xlu0 %v1011
        %v1013 = vpop.xlane.xlu0 %1012
        %v1014 = vsub.f32 %v1006, %v1010
        %v1015 = vsub.f32 %v1007, %v1013
        %v1016 = vmul.f32 %v1014, 1.442695
        %v1017 = vpow.pop %v1016
        %v1018 = vmul.f32 %v1015, 1.442695
        %v1019 = vpow.pop %v1018
        %v1020 = vsel %vm485, %v1017, 0.0
        %1021 = vadd.xlane.f32.xlu0 %v1020
        %v1022 = vpop.xlane.xlu0 %1021
        %v1023 = vsel %vm485, %v1019, 0.0
        %1024 = vadd.xlane.f32.xlu0 %v1023
        %v1025 = vpop.xlane.xlu0 %1024
        %v1026 = vrcp.pop %v1022
        %v1027 = vrcp.pop %v1025
        %v1028 = vmul.f32 %v1017, %v1026
        %v1029 = vmul.f32 %v1019, %v1027
        %v1030 = vpack.c.bf16 %v1029, %v1028
        %1031 = vrot.lane.b32.xlu0 %v535, 16
        %v1032 = vpop.permute.xlu0 %1031
        %v1035 = vsel %vm485, %v1030, 0
        %1037 = vmatpush.bf16.msra.mxu0 0
        %1038 = vmatpush.bf16.msra.mxu0 0
        %1039 = vmatpush.bf16.msra.mxu0 0
        %1040 = vmatpush.bf16.msra.mxu0 0
        %1041 = vmatpush.bf16.msra.mxu0 0
        %1042 = vmatpush.bf16.msra.mxu0 0
        %1043 = vmatpush.bf16.msra.mxu0 0
        %1044 = vmatpush.bf16.msra.mxu0 %v1032
        %1045 = vmatmul.bf16.gmra.mxu0 %v1035
        %v1046 = vpop.f32.mrf.mxu0
        %v1047 = vadd.f32 0.0, %v1046
        %v1048 = vpop.f32.mrf.mxu0
        %v1049 = vadd.f32 0.0, %v1048
        %1050 = vdwg.mxu0
        %v1051 = vpack.c.bf16 %v1047, %v1047
        %v1052 = vpack.c.bf16 %v1049, %v1049
        %v1055 = vunpack.c.l.b16 %v554
        %v1056 = vunpack.c.l.b16 %v555
        %v1057 = vpack.c.b16 %v1056, %v1055
        %v1060 = vunpack.c.l.b16 %v625
        %v1061 = vunpack.c.l.b16 %v626
        %v1062 = vpack.c.b16 %v1061, %v1060
        %1063 = vrot.lane.b32.xlu0 %v1062, 16
        %v1064 = vpop.permute.xlu0 %1063
        %v1067 = vunpack.c.l.b16 %v696
        %v1068 = vunpack.c.l.b16 %v697
        %v1069 = vpack.c.b16 %v1068, %v1067
        %1070 = vrot.lane.b32.xlu0 %v1069, 32
        %v1071 = vpop.permute.xlu0 %1070
        %v1074 = vunpack.c.l.b16 %v767
        %v1075 = vunpack.c.l.b16 %v768
        %v1076 = vpack.c.b16 %v1075, %v1074
        %1077 = vrot.lane.b32.xlu0 %v1076, 48
        %v1078 = vpop.permute.xlu0 %1077
        %v1081 = vunpack.c.l.b16 %v838
        %v1082 = vunpack.c.l.b16 %v839
        %v1083 = vpack.c.b16 %v1082, %v1081
        %1084 = vrot.lane.b32.xlu0 %v1083, 64
        %v1085 = vpop.permute.xlu0 %1084
        %v1088 = vunpack.c.l.b16 %v909
        %v1089 = vunpack.c.l.b16 %v910
        %v1090 = vpack.c.b16 %v1089, %v1088
        %1091 = vrot.lane.b32.xlu0 %v1090, 80
        %v1092 = vpop.permute.xlu0 %1091
        %v1095 = vunpack.c.l.b16 %v980
        %v1096 = vunpack.c.l.b16 %v981
        %v1097 = vpack.c.b16 %v1096, %v1095
        %1098 = vrot.lane.b32.xlu0 %v1097, 96
        %v1099 = vpop.permute.xlu0 %1098
        %v1102 = vunpack.c.l.b16 %v1051
        %v1103 = vunpack.c.l.b16 %v1052
        %v1104 = vpack.c.b16 %v1103, %v1102
        %1105 = vrot.lane.b32.xlu0 %v1104, 112
        %v1106 = vpop.permute.xlu0 %1105
        %v1109 = vsel %vm485, %v1057, %v1064
        %vm1110 = vcmask 261120
        %v1112 = vsel %vm1110, %v1109, %v1071
        %vm1113 = vcmask 392192
        %v1115 = vsel %vm1113, %v1112, %v1078
        %vm1116 = vcmask 523264
        %v1118 = vsel %vm1116, %v1115, %v1085
        %vm1119 = vcmask 654336
        %v1121 = vsel %vm1119, %v1118, %v1092
        %vm1122 = vcmask 785408
        %v1124 = vsel %vm1122, %v1121, %v1099
        %vm1125 = vcmask 916480
        %v1127 = vsel %vm1125, %v1124, %v1106
        %v1129 = vld [vmem:[#allocation2] sm:$0xff]
        %v1130 = vld [vmem:[#allocation2 + $0x8] sm:$0xff]
        %v1131 = vld [vmem:[#allocation6] sm:$0xf]
        %v1132 = vld [vmem:[#allocation6 + $0x4] sm:$0xf]
        %v1133 = vld [vmem:[#allocation6 + $0x8] sm:$0xf]
        %v1134 = vld [vmem:[#allocation6 + $0xc] sm:$0xf]
        %v1135 = vld [vmem:[#allocation6 + $0x10] sm:$0xf]
        %v1136 = vld [vmem:[#allocation6 + $0x14] sm:$0xf]
        %v1137 = vld [vmem:[#allocation6 + $0x18] sm:$0xf]
        %v1138 = vld [vmem:[#allocation6 + $0x1c] sm:$0xf]
        %v1139 = vld [vmem:[#allocation6 + $0x20] sm:$0xf]
        %v1140 = vld [vmem:[#allocation6 + $0x24] sm:$0xf]
        %v1141 = vld [vmem:[#allocation6 + $0x28] sm:$0xf]
        %v1142 = vld [vmem:[#allocation6 + $0x2c] sm:$0xf]
        %v1143 = vld [vmem:[#allocation6 + $0x30] sm:$0xf]
        %v1144 = vld [vmem:[#allocation6 + $0x34] sm:$0xf]
        %v1145 = vld [vmem:[#allocation6 + $0x38] sm:$0xf]
        %v1146 = vld [vmem:[#allocation6 + $0x3c] sm:$0xf]
        %v1163 = vunpack.c.l.b16 %v1131
        %v1164 = vunpack.c.l.b16 %v1132
        %v1165 = vunpack.c.l.b16 %v1133
        %v1166 = vunpack.c.l.b16 %v1134
        %v1167 = vunpack.c.l.b16 %v1135
        %v1168 = vunpack.c.l.b16 %v1136
        %v1169 = vunpack.c.l.b16 %v1137
        %v1170 = vunpack.c.l.b16 %v1138
        %v1171 = vunpack.c.l.b16 %v1139
        %v1172 = vunpack.c.l.b16 %v1140
        %v1173 = vunpack.c.l.b16 %v1141
        %v1174 = vunpack.c.l.b16 %v1142
        %v1175 = vunpack.c.l.b16 %v1143
        %v1176 = vunpack.c.l.b16 %v1144
        %v1177 = vunpack.c.l.b16 %v1145
        %v1178 = vunpack.c.l.b16 %v1146
        %v1179 = vpack.c.b16 %v1164, %v1163
        %v1180 = vpack.c.b16 %v1166, %v1165
        %v1181 = vpack.c.b16 %v1168, %v1167
        %v1182 = vpack.c.b16 %v1170, %v1169
        %v1183 = vpack.c.b16 %v1172, %v1171
        %v1184 = vpack.c.b16 %v1174, %v1173
        %v1185 = vpack.c.b16 %v1176, %v1175
        %v1186 = vpack.c.b16 %v1178, %v1177
        %1195 = vmatpush.bf16.msra.mxu0 %v1186
        %1196 = vmatpush.bf16.msra.mxu0 %v1185
        %1197 = vmatpush.bf16.msra.mxu0 %v1184
        %1198 = vmatpush.bf16.msra.mxu0 %v1183
        %1199 = vmatpush.bf16.msra.mxu0 %v1182
        %1200 = vmatpush.bf16.msra.mxu0 %v1181
        %1201 = vmatpush.bf16.msra.mxu0 %v1180
        %1202 = vmatpush.bf16.msra.mxu0 %v1179
        %1203 = vmatmul.bf16.gmra.mxu0 %v1127
        %v1204 = vpop.f32.mrf.mxu0
        %v1205 = vadd.f32 0.0, %v1204
        %v1206 = vpop.f32.mrf.mxu0
        %v1207 = vadd.f32 0.0, %v1206
        %1208 = vdwg.mxu0
        %v1209 = vadd.f32 %v1129, %v1205
        %v1210 = vadd.f32 %v1130, %v1207
        %1211 = vst [vmem:[#allocation2] sm:$0xff] %v1209
        %1212 = vst [vmem:[#allocation2 + $0x8] sm:$0xff] %v1210
        // Predicated region
        $region172: #{attention_forward.3} parent=150 // pred_check
          %p1213 = pneg %p463
        $region173: #{attention_forward.3} parent=150 // pred_check_branch
          %1215 = sbr.rel (%p1213) target = $region175
        $region174: #{attention_forward.3} parent=150 // pred_region
          %v1216 = vld [vmem:[#allocation2] sm:$0xff]
          %v1217 = vld [vmem:[#allocation2 + $0x8] sm:$0xff]
          %v1218 = vld [vmem:[%s4] sm:$0x1]
          %v1219 = vunpack.c.l.bf16 %v1218
          %v1220 = vperm.slane %v1219, 0
          %v1221 = vadd.f32 %v1216, %v1220
          %v1222 = vadd.f32 %v1217, %v1220
          %1223 = vst [vmem:[%s458] sm:$0xff] %v1221
          %1224 = vst [vmem:[%s458 + $0x8] sm:$0xff] %v1222
        $region175: #{attention_forward.3} parent=150 // pred_fallthru
          _
        %s1225 = sand.u32 %s175, 1
        %s1226 = scalar_lea.sflag [#allocation8], %s1225
        %s1227 = sand.u32 %s175, 1
        %s1228 = smul.addr %s1227, 16
        %s1229 = scalar_lea.vmem [#allocation9], %s1228
        // Predicated region
        $region176: #{attention_forward.3} parent=150 // pred_check
          %p1230 = pneg %p185
        $region177: #{attention_forward.3} parent=150 // pred_check_branch
          %1232 = sbr.rel (%p1230) target = $region179
        $region178: #{attention_forward.3} parent=150 // pred_region
          %1234 = vsyncadd %s1226, 0
          %s1235 = smul.addr %s24, 2
          %s1236 = smul.addr %s1235, 8
          %s1237 = scalar_lea.hbm %s5, %s1236
          %s1238 = sshll.u32 %s1229, 4
          %s1239 = int_to_ptr.vmem [resolvable:$true] %s1238
          %s1240 = sshll.u32 %s1237, 4
          %s1241 = int_to_ptr.hbm [resolvable:$true] %s1240
          %1246 = dma.vmem_to_hbm [thread:$0]  %s1239, 256, %s1241, %s1226, 128, 128, 8
        $region179: #{attention_forward.3} parent=150 // pred_fallthru
          _
      $region151: #{attention_forward.3} parent=5 // pred_fallthru
        _
      %p1247 = scmp.le.s32.totalorder 2, %s15
      // Predicated region
      $region180: #{attention_forward.3} parent=5 // pred_check
        %p1248 = pneg %p1247
      $region181: #{attention_forward.3} parent=5 // pred_check_branch
        %1250 = sbr.rel (%p1248) target = $region183
      $region182: #{attention_forward.3} parent=5 // pred_region
        %s1251 = ssub.s32 %s15, 2
        // Predicated region
        $region184: #{attention_forward.3} parent=182 // pred_check
          %p1252 = pneg %p191
        $region185: #{attention_forward.3} parent=182 // pred_check_branch
          %1254 = sbr.rel (%p1252) target = $region187
        $region186: #{attention_forward.3} parent=182 // pred_region
          %s1255 = sand.u32 %s176, 1
          %s1256 = scalar_lea.sflag [#allocation8], %s1255
          %s1257 = sand.u32 %s176, 1
          %s1258 = smul.addr %s1257, 16
          %s1259 = scalar_lea.vmem [#allocation9], %s1258
          %1261 = dma.done %s1256, 256
        $region187: #{attention_forward.3} parent=182 // pred_fallthru
          _
      $region183: #{attention_forward.3} parent=5 // pred_fallthru
        _
    $region6: #{attention_forward.3} parent=1 // loop_footer
      %s19 = sadd.s32 1, %s15
    $region7: #{attention_forward.3} parent=1 // loop_footer_branch
      %14 = sbr.rel target = $region3
    $region8: #{attention_forward.3} parent=1 // loop_exit
      _
    %1262 = vsyncpa [#allocation7], 1
    %s1263 = scalar_lea.sflag [#allocation7], 1
    %1264 = vsyncpa %s1263, 1
    %1265 = vsyncpa [#allocation8], 1
    %s1266 = scalar_lea.sflag [#allocation8], 1
    %1267 = vsyncpa %s1266, 1

</llo_original>
